<compile_context>
chip_gen: v7x
topology: tpu7x:2x2x1
jax: 0.10.0
libtpu: 0.0.40
codegen_flags: <defaults>
</compile_context>

<pallas_src>
import functools
import math

import jax
import jax.numpy as jnp
from jax import lax
from jax.experimental import pallas as pl
from jax.experimental.pallas import tpu as pltpu

_NEG_INF = -1e30
# Squeeze leading batch axis out of kernel refs (fallback to the None form).
_SQUEEZE = pl.Squeezed() if hasattr(pl, "Squeezed") else None


def _vmem_limit_bytes():
    """Generation-aware scoped-VMEM budget: ~75% of physical VMEM
    (≈96 MiB on v5e/v6e's 128 MiB, ≈48 MiB on v7x's 64 MiB), leaving headroom
    for compiler internal scratch.  Conservative 48 MiB fallback."""
    cap = None
    try:
        cap = getattr(pltpu.get_tpu_info(), "vmem_capacity_bytes", None)
    except Exception:
        cap = None
    if not cap:
        cap = 64 * 1024 * 1024
    return int(cap) * 3 // 4


def _heads_per_group(num_heads, head_dim):
    """Heads processed per attention grid step.

    Chosen so the attention block width (G*head_dim) is either a multiple of
    128 lanes (lane-dense, unmasked HBM loads/stores) or covers all heads
    (block == full feature dim, always a legal BlockSpec)."""
    if head_dim % 128 == 0:
        return 1
    for g in range(1, num_heads + 1):
        if num_heads % g == 0 and (g * head_dim) % 128 == 0:
            return g
    return num_heads


# --------------------------------------------------------------------------------------
# in-kernel helpers (f32 math)
# --------------------------------------------------------------------------------------
def _layernorm(x, gamma, beta, eps=1e-5):
    mean = jnp.mean(x, axis=-1, keepdims=True)
    var = jnp.mean(jnp.square(x - mean), axis=-1, keepdims=True)
    return (x - mean) * lax.rsqrt(var + eps) * gamma + beta


def _gelu_exact(x):
    # exact erf-based GELU (torch nn.GELU default)
    return 0.5 * x * (1.0 + lax.erf(x * (1.0 / math.sqrt(2.0))))


# --------------------------------------------------------------------------------------
# kernel 1: ln1 + fused QKV projection (row-tiled over B*N)
# --------------------------------------------------------------------------------------
def ln_qkv_kernel(x_ref, g1_ref, b1_ref, wqkv_ref, bqkv_ref,
                  q_ref, k_ref, v_ref, *, embed_dim):
    C = embed_dim
    xn = _layernorm(x_ref[...].astype(jnp.float32), g1_ref[...], b1_ref[...])
    xb = xn.astype(wqkv_ref.dtype)                                   # bf16 MXU operand
    # single (tm, C) x (C, 3C) matmul; attention scale is pre-folded into the Q columns
    qkv = jnp.dot(xb, wqkv_ref[...],
                  preferred_element_type=jnp.float32) + bqkv_ref[...]
    q_ref[...] = qkv[:, 0 * C:1 * C].astype(q_ref.dtype)
    k_ref[...] = qkv[:, 1 * C:2 * C].astype(k_ref.dtype)
    v_ref[...] = qkv[:, 2 * C:3 * C].astype(v_ref.dtype)


# --------------------------------------------------------------------------------------
# kernel 2: flash attention, grid = (B, head-groups, q-tiles, kv-tiles)
#           Q/K/V/ctx all live in the (B, N, C) layout -> no transposes anywhere.
# --------------------------------------------------------------------------------------
def flash_attn_kernel(q_ref, k_ref, v_ref, o_ref, m_sc, l_sc, acc_sc,
                      *, heads_per_blk, head_dim, seq_len, k_tile):
    kv = pl.program_id(3)

    @pl.when(kv == 0)
    def _init():
        m_sc[...] = jnp.full_like(m_sc[...], _NEG_INF)
        l_sc[...] = jnp.zeros_like(l_sc[...])
        acc_sc[...] = jnp.zeros_like(acc_sc[...])

    tq = q_ref.shape[0]
    tk = k_ref.shape[0]
    needs_key_mask = (seq_len % k_tile) != 0
    if needs_key_mask:  # static: only emitted when the last KV tile is ragged
        col = kv * k_tile + lax.broadcasted_iota(jnp.int32, (tq, tk), 1)
        key_mask = col < seq_len
        vrow = kv * k_tile + lax.broadcasted_iota(jnp.int32, (tk, head_dim), 0)
        v_mask = vrow < seq_len
    # NOTE: padded *query* rows (seq_len % q_tile != 0) may compute on undefined
    # data; results are clipped on write so this is benign.

    # static per-head unroll: all ops stay 2-D (no in-kernel head transposes)
    for g in range(heads_per_blk):
        hs = g * head_dim
        q_g = q_ref[:, hs:hs + head_dim]                    # (tq, hd) bf16
        k_g = k_ref[:, hs:hs + head_dim]                    # (tk, hd) bf16
        v_g = v_ref[:, hs:hs + head_dim]                    # (tk, hd) bf16
        # 1/sqrt(head_dim) already folded into the Q projection weights.
        s = lax.dot_general(q_g, k_g, (((1,), (1,)), ((), ())),
                            preferred_element_type=jnp.float32)      # (tq, tk)
        if needs_key_mask:
            s = jnp.where(key_mask, s, _NEG_INF)
            v_g = jnp.where(v_mask, v_g, jnp.zeros_like(v_g))
        m_prev = m_sc[:, g:g + 1]
        m_new = jnp.maximum(m_prev, jnp.max(s, axis=-1, keepdims=True))
        alpha = jnp.exp(m_prev - m_new)
        p = jnp.exp(s - m_new)
        l_sc[:, g:g + 1] = alpha * l_sc[:, g:g + 1] + jnp.sum(p, axis=-1, keepdims=True)
        acc_sc[:, hs:hs + head_dim] = (
            alpha * acc_sc[:, hs:hs + head_dim]
            + jnp.dot(p.astype(v_g.dtype), v_g, preferred_element_type=jnp.float32))
        m_sc[:, g:g + 1] = m_new

    @pl.when(kv == pl.num_programs(3) - 1)
    def _finalize():
        for g in range(heads_per_blk):
            hs = g * head_dim
            inv = pl.reciprocal(l_sc[:, g:g + 1], approx=False)   # exact: tighter parity
            o_ref[:, hs:hs + head_dim] = (
                acc_sc[:, hs:hs + head_dim] * inv).astype(o_ref.dtype)


# --------------------------------------------------------------------------------------
# kernel 3: out-proj + residual + ln2 + MLP + residual (row-tiled over B*N)
# --------------------------------------------------------------------------------------
def proj_mlp_kernel(x_ref, ctx_ref, ow_ref, ob_ref, g2_ref, b2_ref,
                    w1_ref, mb1_ref, w2_ref, mb2_ref, o_ref):
    a = jnp.dot(ctx_ref[...], ow_ref[...],
                preferred_element_type=jnp.float32) + ob_ref[...]
    x1 = x_ref[...].astype(jnp.float32) + a                       # residual 1
    xn2 = _layernorm(x1, g2_ref[...], b2_ref[...])
    h = jnp.dot(xn2.astype(w1_ref.dtype), w1_ref[...],
                preferred_element_type=jnp.float32) + mb1_ref[...]
    h = _gelu_exact(h)
    # TODO(synk): nn.Dropout(0.1) is identity in eval mode; training-mode RNG dropout not implemented.
    y = jnp.dot(h.astype(w2_ref.dtype), w2_ref[...],
                preferred_element_type=jnp.float32) + mb2_ref[...]
    o_ref[...] = (x1 + y).astype(o_ref.dtype)                     # residual 2


# --------------------------------------------------------------------------------------
# wrapper
# --------------------------------------------------------------------------------------
def transformer_encoder(x, params, num_heads, *,
                        row_tile=512, q_tile=256, k_tile=256,
                        compute_dtype=jnp.bfloat16):
    """Pre-LN transformer encoder block forward.

    Tile defaults target v6e/v7x (256-wide MXU, big VMEM); on v5e prefer
    q_tile = k_tile = 128 (4x128^2 MXU)."""
    B, N, C = x.shape
    H = num_heads
    assert C % H == 0
    hd = C // H
    rows = B * N

    f32 = jnp.float32
    cd = compute_dtype
    vmem_limit = _vmem_limit_bytes()

    tm = min(row_tile, rows)      # rows per step for the projection / MLP kernels
    tq = min(q_tile, N)           # query tile
    tk = min(k_tile, N)           # key/value tile

    G = _heads_per_group(H, hd)   # heads per attention grid step
    n_groups = H // G
    bw = G * hd                   # attention block width (lane-dense when possible)

    # ---- one-time, weight-sized plumbing: fold 1/sqrt(hd) into Q weights, cast to bf16
    scale = 1.0 / math.sqrt(hd)
    col_scale = jnp.concatenate(
        [jnp.full((1, C), scale, f32), jnp.ones((1, 2 * C), f32)], axis=1)
    wqkv = (params["qkvw"] * col_scale).astype(cd)            # (C, 3C)
    bqkv = (params["qkvb"] * col_scale).astype(f32)           # (1, 3C)
    ow, ob = params["ow"].astype(cd), params["ob"].astype(f32)
    w1, mb1 = params["w1"].astype(cd), params["b1"].astype(f32)
    w2, mb2 = params["w2"].astype(cd), params["b2"].astype(f32)
    ln1w, ln1b = params["ln1w"].astype(f32), params["ln1b"].astype(f32)
    ln2w, ln2b = params["ln2w"].astype(f32), params["ln2b"].astype(f32)

    x2 = x.reshape(rows, C).astype(f32)

    row_spec = pl.BlockSpec((tm, C), lambda i: (i, 0))

    def full(a):  # grid-invariant weight block
        # TODO(synk): single-buffer these invariant blocks / tile the MLP hidden dim
        # for very large C under v7x's 64 MiB VMEM.
        return pl.BlockSpec(a.shape, lambda i: (0, 0))

    # ---------------- kernel 1: ln1 + fused QKV ----------------
    w_args1 = (ln1w, ln1b, wqkv, bqkv)
    q2, k2, v2 = pl.pallas_call(
        functools.partial(ln_qkv_kernel, embed_dim=C),
        out_shape=tuple(jax.ShapeDtypeStruct((rows, C), cd) for _ in range(3)),
        grid_spec=pltpu.PrefetchScalarGridSpec(
            num_scalar_prefetch=0,
            grid=(pl.cdiv(rows, tm),),
            in_specs=[row_spec] + [full(a) for a in w_args1],
            out_specs=tuple(row_spec for _ in range(3)),
        ),
        compiler_params=pltpu.CompilerParams(
            dimension_semantics=("parallel",),
            vmem_limit_bytes=vmem_limit),
    )(x2, *w_args1)

    # ---------------- kernel 2: flash attention (no transposes) ----------------
    qh, kh, vh = (q2.reshape(B, N, C), k2.reshape(B, N, C), v2.reshape(B, N, C))

    attn_fn = functools.partial(flash_attn_kernel, heads_per_blk=G,
                                head_dim=hd, seq_len=N, k_tile=tk)
    q_spec = pl.BlockSpec((_SQUEEZE, tq, bw), lambda b, g, i, j: (b, i, g))
    kv_spec = pl.BlockSpec((_SQUEEZE, tk, bw), lambda b, g, i, j: (b, j, g))
    o_spec = pl.BlockSpec((_SQUEEZE, tq, bw), lambda b, g, i, j: (b, i, g))

    ctx = pl.pallas_call(
        attn_fn,
        out_shape=jax.ShapeDtypeStruct((B, N, C), cd),
        grid_spec=pltpu.PrefetchScalarGridSpec(
            num_scalar_prefetch=0,
            grid=(B, n_groups, pl.cdiv(N, tq), pl.cdiv(N, tk)),
            in_specs=[q_spec, kv_spec, kv_spec],
            out_specs=o_spec,
            scratch_shapes=[pltpu.VMEM((tq, G), f32),     # running max (per head)
                            pltpu.VMEM((tq, G), f32),     # running sum (per head)
                            pltpu.VMEM((tq, bw), f32)],   # output accumulator
        ),
        compiler_params=pltpu.CompilerParams(
            dimension_semantics=("parallel", "parallel", "parallel", "arbitrary"),
            vmem_limit_bytes=vmem_limit),
    )(qh, kh, vh)

    ctx2 = ctx.reshape(rows, C)       # free row-major reshape, no transpose

    # ---------------- kernel 3: out-proj + residual + ln2 + MLP + residual ----------------
    w_args3 = (ow, ob, ln2w, ln2b, w1, mb1, w2, mb2)
    y2 = pl.pallas_call(
        proj_mlp_kernel,
        out_shape=jax.ShapeDtypeStruct((rows, C), x.dtype),
        grid_spec=pltpu.PrefetchScalarGridSpec(
            num_scalar_prefetch=0,
            grid=(pl.cdiv(rows, tm),),
            in_specs=[row_spec, row_spec] + [full(a) for a in w_args3],
            out_specs=row_spec,
        ),
        compiler_params=pltpu.CompilerParams(
            dimension_semantics=("parallel",),
            vmem_limit_bytes=vmem_limit),
    )(x2, ctx2, *w_args3)

    return y2.reshape(B, N, C)


# --------------------------------------------------------------------------------------
# params / reference / demo
# --------------------------------------------------------------------------------------
def make_params(key, embed_dim, num_heads, mlp_dim):
    C = embed_dim
    ks = jax.random.split(key, 4)
    std = 0.02
    # Linear weights stored (in, out) = PyTorch weight.T
    return {
        "ln1w": jnp.ones((1, C), jnp.float32),
        "ln1b": jnp.zeros((1, C), jnp.float32),
        "qkvw": std * jax.random.normal(ks[0], (C, 3 * C), jnp.float32),
        "qkvb": jnp.zeros((1, 3 * C), jnp.float32),
        "ow":   std * jax.random.normal(ks[1], (C, C), jnp.float32),
        "ob":   jnp.zeros((1, C), jnp.float32),
        "ln2w": jnp.ones((1, C), jnp.float32),
        "ln2b": jnp.zeros((1, C), jnp.float32),
        "w1":   std * jax.random.normal(ks[2], (C, mlp_dim), jnp.float32),
        "b1":   jnp.zeros((1, mlp_dim), jnp.float32),
        "w2":   std * jax.random.normal(ks[3], (mlp_dim, C), jnp.float32),
        "b2":   jnp.zeros((1, C), jnp.float32),
    }


def reference(x, p, num_heads):
    # pure-JAX f32 reference mirroring the PyTorch forward (eval mode)
    B, N, C = x.shape
    hd = C // num_heads

    def ln(v, w, b):
        m = jnp.mean(v, -1, keepdims=True)
        var = jnp.mean((v - m) ** 2, -1, keepdims=True)
        return (v - m) / jnp.sqrt(var + 1e-5) * w + b

    xn = ln(x, p["ln1w"], p["ln1b"])
    qkv = xn @ p["qkvw"] + p["qkvb"]
    qkv = qkv.reshape(B, N, 3, num_heads, hd).transpose(2, 0, 3, 1, 4)
    q, k, v = qkv[0], qkv[1], qkv[2]
    scores = jnp.einsum("bhnd,bhmd->bhnm", q, k) / hd ** 0.5
    attn = jax.nn.softmax(scores, axis=-1)
    a = jnp.einsum("bhnm,bhmd->bhnd", attn, v).transpose(0, 2, 1, 3).reshape(B, N, C)
    x1 = x + (a @ p["ow"] + p["ob"])
    xn2 = ln(x1, p["ln2w"], p["ln2b"])
    h = jax.nn.gelu(xn2 @ p["w1"] + p["b1"], approximate=False)
    return x1 + (h @ p["w2"] + p["b2"])


if __name__ == "__main__":
    B, N = 2, 8
    embed_dim, num_heads, mlp_dim = 32, 4, 64

    key = jax.random.PRNGKey(0)
    kx, kp = jax.random.split(key)
    x = jax.random.normal(kx, (B, N, embed_dim), jnp.float32)
    params = make_params(kp, embed_dim, num_heads, mlp_dim)

    fwd = jax.jit(functools.partial(transformer_encoder, num_heads=num_heads))
    out = jax.block_until_ready(fwd(x, params))

    ref = reference(x, params, num_heads)
    assert out.shape == (B, N, embed_dim)
    err = float(jnp.max(jnp.abs(out - ref)))
    assert jnp.allclose(out, ref, rtol=2e-2, atol=2e-2), f"max err {err}"
    print("KERNEL_OK")
</pallas_src>

<mosaic_0001>
module attributes {stable_mosaic.version = 11 : i64} {
  func.func @ln_qkv_kernel(%arg0: i32, %arg1: memref<16x32xf32, #tpu.memory_space<vmem>>, %arg2: memref<1x32xf32, #tpu.memory_space<vmem>>, %arg3: memref<1x32xf32, #tpu.memory_space<vmem>>, %arg4: memref<32x96xbf16, #tpu.memory_space<vmem>>, %arg5: memref<1x96xf32, #tpu.memory_space<vmem>>, %arg6: memref<16x32xbf16, #tpu.memory_space<vmem>>, %arg7: memref<16x32xbf16, #tpu.memory_space<vmem>>, %arg8: memref<16x32xbf16, #tpu.memory_space<vmem>>) attributes {dimension_semantics = [#tpu.dimension_semantics<parallel>], iteration_bounds = array<i64: 1>, scalar_prefetch = 0 : i64, scratch_operands = 0 : i64, tpu.core_type = #tpu.core_type<tc>, window_params = [{transform_indices = @transform_0, window_bounds = array<i64: 16, 32>}, {pipeline_mode = #tpu.pipeline_mode<synchronous>, transform_indices = @transform_1, window_bounds = array<i64: 1, 32>}, {pipeline_mode = #tpu.pipeline_mode<synchronous>, transform_indices = @transform_2, window_bounds = array<i64: 1, 32>}, {pipeline_mode = #tpu.pipeline_mode<synchronous>, transform_indices = @transform_3, window_bounds = array<i64: 32, 96>}, {pipeline_mode = #tpu.pipeline_mode<synchronous>, transform_indices = @transform_4, window_bounds = array<i64: 1, 96>}, {transform_indices = @transform_5, window_bounds = array<i64: 16, 32>}, {transform_indices = @transform_6, window_bounds = array<i64: 16, 32>}, {transform_indices = @transform_7, window_bounds = array<i64: 16, 32>}]} {
    %c0 = arith.constant 0 : index
    %c0_0 = arith.constant 0 : index
    %0 = vector.load %arg1[%c0, %c0_0] : memref<16x32xf32, #tpu.memory_space<vmem>>, vector<16x32xf32>
    %c0_1 = arith.constant 0 : index
    %c0_2 = arith.constant 0 : index
    %1 = vector.load %arg2[%c0_1, %c0_2] : memref<1x32xf32, #tpu.memory_space<vmem>>, vector<1x32xf32>
    %c0_3 = arith.constant 0 : index
    %c0_4 = arith.constant 0 : index
    %2 = vector.load %arg3[%c0_3, %c0_4] : memref<1x32xf32, #tpu.memory_space<vmem>>, vector<1x32xf32>
    %cst = arith.constant dense<0.000000e+00> : vector<16xf32>
    %3 = vector.multi_reduction <add>, %0, %cst [1] : vector<16x32xf32> to vector<16xf32>
    %4 = vector.shape_cast %3 : vector<16xf32> to vector<16x1xf32>
    %cst_5 = arith.constant 3.200000e+01 : f32
    %5 = vector.broadcast %cst_5 : f32 to vector<16x1xf32>
    %6 = arith.divf %4, %5 : vector<16x1xf32>
    %7 = vector.broadcast %6 : vector<16x1xf32> to vector<16x32xf32>
    %8 = arith.subf %0, %7 : vector<16x32xf32>
    %9 = arith.mulf %8, %8 : vector<16x32xf32>
    %cst_6 = arith.constant dense<0.000000e+00> : vector<16xf32>
    %10 = vector.multi_reduction <add>, %9, %cst_6 [1] : vector<16x32xf32> to vector<16xf32>
    %11 = vector.shape_cast %10 : vector<16xf32> to vector<16x1xf32>
    %cst_7 = arith.constant 3.200000e+01 : f32
    %12 = vector.broadcast %cst_7 : f32 to vector<16x1xf32>
    %13 = arith.divf %11, %12 : vector<16x1xf32>
    %14 = vector.broadcast %6 : vector<16x1xf32> to vector<16x32xf32>
    %15 = arith.subf %0, %14 : vector<16x32xf32>
    %cst_8 = arith.constant 9.99999974E-6 : f32
    %16 = vector.broadcast %cst_8 : f32 to vector<16x1xf32>
    %17 = arith.addf %13, %16 : vector<16x1xf32>
    %18 = math.rsqrt %17 : vector<16x1xf32>
    %19 = vector.broadcast %18 : vector<16x1xf32> to vector<16x32xf32>
    %20 = arith.mulf %15, %19 : vector<16x32xf32>
    %21 = vector.broadcast %1 : vector<1x32xf32> to vector<16x32xf32>
    %22 = arith.mulf %20, %21 : vector<16x32xf32>
    %23 = vector.broadcast %2 : vector<1x32xf32> to vector<16x32xf32>
    %24 = arith.addf %22, %23 : vector<16x32xf32>
    %25 = arith.truncf %24 : vector<16x32xf32> to vector<16x32xbf16>
    %c0_9 = arith.constant 0 : index
    %c0_10 = arith.constant 0 : index
    %26 = vector.load %arg4[%c0_9, %c0_10] : memref<32x96xbf16, #tpu.memory_space<vmem>>, vector<32x96xbf16>
    %cst_11 = arith.constant dense<0.000000e+00> : vector<16x96xf32>
    %27 = tpu.matmul %25, %26, %cst_11 {dimension_numbers = #tpu.dot_dimension_numbers<[1], [0], [0], [1], [0, 0, 1, 1], [], []>} : vector<16x32xbf16>, vector<32x96xbf16>, vector<16x96xf32> -> vector<16x96xf32>
    %c0_12 = arith.constant 0 : index
    %c0_13 = arith.constant 0 : index
    %28 = vector.load %arg5[%c0_12, %c0_13] : memref<1x96xf32, #tpu.memory_space<vmem>>, vector<1x96xf32>
    %29 = vector.broadcast %28 : vector<1x96xf32> to vector<16x96xf32>
    %30 = arith.addf %27, %29 : vector<16x96xf32>
    %31 = vector.extract_strided_slice %30 {offsets = [0, 0], sizes = [16, 32], strides = [1, 1]} : vector<16x96xf32> to vector<16x32xf32>
    %32 = arith.truncf %31 : vector<16x32xf32> to vector<16x32xbf16>
    %c0_14 = arith.constant 0 : index
    %c0_15 = arith.constant 0 : index
    %33 = vector.load %arg6[%c0_14, %c0_15] : memref<16x32xbf16, #tpu.memory_space<vmem>>, vector<16x32xbf16>
    tpu.vector_store %arg6[%c0_14, %c0_15], %32 {strides = array<i32>} : memref<16x32xbf16, #tpu.memory_space<vmem>>, vector<16x32xbf16>,
    %34 = vector.extract_strided_slice %30 {offsets = [0, 32], sizes = [16, 32], strides = [1, 1]} : vector<16x96xf32> to vector<16x32xf32>
    %35 = arith.truncf %34 : vector<16x32xf32> to vector<16x32xbf16>
    %c0_16 = arith.constant 0 : index
    %c0_17 = arith.constant 0 : index
    %36 = vector.load %arg7[%c0_16, %c0_17] : memref<16x32xbf16, #tpu.memory_space<vmem>>, vector<16x32xbf16>
    tpu.vector_store %arg7[%c0_16, %c0_17], %35 {strides = array<i32>} : memref<16x32xbf16, #tpu.memory_space<vmem>>, vector<16x32xbf16>,
    %37 = vector.extract_strided_slice %30 {offsets = [0, 64], sizes = [16, 32], strides = [1, 1]} : vector<16x96xf32> to vector<16x32xf32>
    %38 = arith.truncf %37 : vector<16x32xf32> to vector<16x32xbf16>
    %c0_18 = arith.constant 0 : index
    %c0_19 = arith.constant 0 : index
    %39 = vector.load %arg8[%c0_18, %c0_19] : memref<16x32xbf16, #tpu.memory_space<vmem>>, vector<16x32xbf16>
    tpu.vector_store %arg8[%c0_18, %c0_19], %38 {strides = array<i32>} : memref<16x32xbf16, #tpu.memory_space<vmem>>, vector<16x32xbf16>,
    return
  }
  func.func @transform_0(%arg0: i32) -> (i32, i32) {
    %c0_i32 = arith.constant 0 : i32
    %c0_i32_0 = arith.constant 0 : i32
    return %arg0, %c0_i32 : i32, i32
  }
  func.func @transform_1(%arg0: i32) -> (i32, i32) {
    %c0_i32 = arith.constant 0 : i32
    %c0_i32_0 = arith.constant 0 : i32
    %c0_i32_1 = arith.constant 0 : i32
    return %c0_i32, %c0_i32_0 : i32, i32
  }
  func.func @transform_2(%arg0: i32) -> (i32, i32) {
    %c0_i32 = arith.constant 0 : i32
    %c0_i32_0 = arith.constant 0 : i32
    %c0_i32_1 = arith.constant 0 : i32
    return %c0_i32, %c0_i32_0 : i32, i32
  }
  func.func @transform_3(%arg0: i32) -> (i32, i32) {
    %c0_i32 = arith.constant 0 : i32
    %c0_i32_0 = arith.constant 0 : i32
    %c0_i32_1 = arith.constant 0 : i32
    return %c0_i32, %c0_i32_0 : i32, i32
  }
  func.func @transform_4(%arg0: i32) -> (i32, i32) {
    %c0_i32 = arith.constant 0 : i32
    %c0_i32_0 = arith.constant 0 : i32
    %c0_i32_1 = arith.constant 0 : i32
    return %c0_i32, %c0_i32_0 : i32, i32
  }
  func.func @transform_5(%arg0: i32) -> (i32, i32) {
    %c0_i32 = arith.constant 0 : i32
    %c0_i32_0 = arith.constant 0 : i32
    return %arg0, %c0_i32 : i32, i32
  }
  func.func @transform_6(%arg0: i32) -> (i32, i32) {
    %c0_i32 = arith.constant 0 : i32
    %c0_i32_0 = arith.constant 0 : i32
    return %arg0, %c0_i32 : i32, i32
  }
  func.func @transform_7(%arg0: i32) -> (i32, i32) {
    %c0_i32 = arith.constant 0 : i32
    %c0_i32_0 = arith.constant 0 : i32
    return %arg0, %c0_i32 : i32, i32
  }
}

module attributes {stable_mosaic.version = 11 : i64} {
  func.func @flash_attn_kernel(%arg0: i32, %arg1: i32, %arg2: i32, %arg3: i32, %arg4: memref<1x8x32xbf16, #tpu.memory_space<vmem>>, %arg5: memref<1x8x32xbf16, #tpu.memory_space<vmem>>, %arg6: memref<1x8x32xbf16, #tpu.memory_space<vmem>>, %arg7: memref<1x8x32xbf16, #tpu.memory_space<vmem>>, %arg8: memref<8x4xf32, #tpu.memory_space<vmem>>, %arg9: memref<8x4xf32, #tpu.memory_space<vmem>>, %arg10: memref<8x32xf32, #tpu.memory_space<vmem>>) attributes {dimension_semantics = [#tpu.dimension_semantics<parallel>, #tpu.dimension_semantics<parallel>, #tpu.dimension_semantics<parallel>, #tpu.dimension_semantics<arbitrary>], iteration_bounds = array<i64: 2, 1, 1, 1>, scalar_prefetch = 0 : i64, scratch_operands = 3 : i64, tpu.core_type = #tpu.core_type<tc>, window_params = [{transform_indices = @transform_0, window_bounds = array<i64: 1, 8, 32>}, {transform_indices = @transform_1, window_bounds = array<i64: 1, 8, 32>}, {transform_indices = @transform_2, window_bounds = array<i64: 1, 8, 32>}, {transform_indices = @transform_3, window_bounds = array<i64: 1, 8, 32>}]} {
    %c0_i32 = arith.constant 0 : i32
    %0 = arith.cmpi eq, %arg3, %c0_i32 : i32
    %1 = arith.extui %0 : i1 to i32
    %c0_i32_0 = arith.constant 0 : i32
    %2 = arith.cmpi ne, %1, %c0_i32_0 : i32
    scf.if %2 {
      %cst_95 = arith.constant -1.000000e+30 : f32
      %126 = vector.broadcast %cst_95 : f32 to vector<8x4xf32>
      %c0_96 = arith.constant 0 : index
      %c0_97 = arith.constant 0 : index
      %127 = vector.load %arg8[%c0_96, %c0_97] : memref<8x4xf32, #tpu.memory_space<vmem>>, vector<8x4xf32>
      tpu.vector_store %arg8[%c0_96, %c0_97], %126 {strides = array<i32>} : memref<8x4xf32, #tpu.memory_space<vmem>>, vector<8x4xf32>,
      %cst_98 = arith.constant 0.000000e+00 : f32
      %128 = vector.broadcast %cst_98 : f32 to vector<8x4xf32>
      %c0_99 = arith.constant 0 : index
      %c0_100 = arith.constant 0 : index
      %129 = vector.load %arg9[%c0_99, %c0_100] : memref<8x4xf32, #tpu.memory_space<vmem>>, vector<8x4xf32>
      tpu.vector_store %arg9[%c0_99, %c0_100], %128 {strides = array<i32>} : memref<8x4xf32, #tpu.memory_space<vmem>>, vector<8x4xf32>,
      %cst_101 = arith.constant 0.000000e+00 : f32
      %130 = vector.broadcast %cst_101 : f32 to vector<8x32xf32>
      %c0_102 = arith.constant 0 : index
      %c0_103 = arith.constant 0 : index
      %131 = vector.load %arg10[%c0_102, %c0_103] : memref<8x32xf32, #tpu.memory_space<vmem>>, vector<8x32xf32>
      tpu.vector_store %arg10[%c0_102, %c0_103], %130 {strides = array<i32>} : memref<8x32xf32, #tpu.memory_space<vmem>>, vector<8x32xf32>,
    } else {
    }
    %c0 = arith.constant 0 : index
    %c0_1 = arith.constant 0 : index
    %c0_2 = arith.constant 0 : index
    %3 = vector.load %arg4[%c0, %c0_1, %c0_2] : memref<1x8x32xbf16, #tpu.memory_space<vmem>>, vector<1x8x8xbf16>
    %4 = vector.shape_cast %3 : vector<1x8x8xbf16> to vector<8x8xbf16>
    %c0_3 = arith.constant 0 : index
    %c0_4 = arith.constant 0 : index
    %c0_5 = arith.constant 0 : index
    %5 = vector.load %arg5[%c0_3, %c0_4, %c0_5] : memref<1x8x32xbf16, #tpu.memory_space<vmem>>, vector<1x8x8xbf16>
    %6 = vector.shape_cast %5 : vector<1x8x8xbf16> to vector<8x8xbf16>
    %c0_6 = arith.constant 0 : index
    %c0_7 = arith.constant 0 : index
    %c0_8 = arith.constant 0 : index
    %7 = vector.load %arg6[%c0_6, %c0_7, %c0_8] : memref<1x8x32xbf16, #tpu.memory_space<vmem>>, vector<1x8x8xbf16>
    %8 = vector.shape_cast %7 : vector<1x8x8xbf16> to vector<8x8xbf16>
    %cst = arith.constant dense<0.000000e+00> : vector<8x8xf32>
    %9 = tpu.matmul %4, %6, %cst {dimension_numbers = #tpu.dot_dimension_numbers<[1], [1], [0], [0], [0, 0, 1, 0], [], []>} : vector<8x8xbf16>, vector<8x8xbf16>, vector<8x8xf32> -> vector<8x8xf32>
    %c0_9 = arith.constant 0 : index
    %c0_10 = arith.constant 0 : index
    %10 = vector.load %arg8[%c0_9, %c0_10] : memref<8x4xf32, #tpu.memory_space<vmem>>, vector<8x1xf32>
    %cst_11 = arith.constant dense<0xFF800000> : vector<8xf32>
    %11 = vector.multi_reduction <maximumf>, %9, %cst_11 [1] : vector<8x8xf32> to vector<8xf32>
    %12 = vector.shape_cast %11 : vector<8xf32> to vector<8x1xf32>
    %13 = arith.maximumf %10, %12 : vector<8x1xf32>
    %14 = arith.subf %10, %13 : vector<8x1xf32>
    %15 = math.exp %14 : vector<8x1xf32>
    %16 = vector.broadcast %13 : vector<8x1xf32> to vector<8x8xf32>
    %17 = arith.subf %9, %16 : vector<8x8xf32>
    %18 = math.exp %17 : vector<8x8xf32>
    %c0_12 = arith.constant 0 : index
    %c0_13 = arith.constant 0 : index
    %19 = vector.load %arg9[%c0_12, %c0_13] : memref<8x4xf32, #tpu.memory_space<vmem>>, vector<8x1xf32>
    %20 = arith.mulf %15, %19 : vector<8x1xf32>
    %cst_14 = arith.constant dense<0.000000e+00> : vector<8xf32>
    %21 = vector.multi_reduction <add>, %18, %cst_14 [1] : vector<8x8xf32> to vector<8xf32>
    %22 = vector.shape_cast %21 : vector<8xf32> to vector<8x1xf32>
    %23 = arith.addf %20, %22 : vector<8x1xf32>
    %c0_15 = arith.constant 0 : index
    %c0_16 = arith.constant 0 : index
    %24 = vector.load %arg9[%c0_15, %c0_16] : memref<8x4xf32, #tpu.memory_space<vmem>>, vector<8x1xf32>
    tpu.vector_store %arg9[%c0_15, %c0_16], %23 {strides = array<i32>} : memref<8x4xf32, #tpu.memory_space<vmem>>, vector<8x1xf32>,
    %c0_17 = arith.constant 0 : index
    %c0_18 = arith.constant 0 : index
    %25 = vector.load %arg10[%c0_17, %c0_18] : memref<8x32xf32, #tpu.memory_space<vmem>>, vector<8x8xf32>
    %26 = vector.broadcast %15 : vector<8x1xf32> to vector<8x8xf32>
    %27 = arith.mulf %26, %25 : vector<8x8xf32>
    %28 = arith.truncf %18 : vector<8x8xf32> to vector<8x8xbf16>
    %cst_19 = arith.constant dense<0.000000e+00> : vector<8x8xf32>
    %29 = tpu.matmul %28, %8, %cst_19 {dimension_numbers = #tpu.dot_dimension_numbers<[1], [0], [0], [1], [0, 0, 1, 1], [], []>} : vector<8x8xbf16>, vector<8x8xbf16>, vector<8x8xf32> -> vector<8x8xf32>
    %30 = arith.addf %27, %29 : vector<8x8xf32>
    %c0_20 = arith.constant 0 : index
    %c0_21 = arith.constant 0 : index
    %31 = vector.load %arg10[%c0_20, %c0_21] : memref<8x32xf32, #tpu.memory_space<vmem>>, vector<8x8xf32>
    tpu.vector_store %arg10[%c0_20, %c0_21], %30 {strides = array<i32>} : memref<8x32xf32, #tpu.memory_space<vmem>>, vector<8x8xf32>,
    %c0_22 = arith.constant 0 : index
    %c0_23 = arith.constant 0 : index
    %32 = vector.load %arg8[%c0_22, %c0_23] : memref<8x4xf32, #tpu.memory_space<vmem>>, vector<8x1xf32>
    tpu.vector_store %arg8[%c0_22, %c0_23], %13 {strides = array<i32>} : memref<8x4xf32, #tpu.memory_space<vmem>>, vector<8x1xf32>,
    %c0_24 = arith.constant 0 : index
    %c0_25 = arith.constant 0 : index
    %c8 = arith.constant 8 : index
    %33 = vector.load %arg4[%c0_24, %c0_25, %c8] : memref<1x8x32xbf16, #tpu.memory_space<vmem>>, vector<1x8x8xbf16>
    %34 = vector.shape_cast %33 : vector<1x8x8xbf16> to vector<8x8xbf16>
    %c0_26 = arith.constant 0 : index
    %c0_27 = arith.constant 0 : index
    %c8_28 = arith.constant 8 : index
    %35 = vector.load %arg5[%c0_26, %c0_27, %c8_28] : memref<1x8x32xbf16, #tpu.memory_space<vmem>>, vector<1x8x8xbf16>
    %36 = vector.shape_cast %35 : vector<1x8x8xbf16> to vector<8x8xbf16>
    %c0_29 = arith.constant 0 : index
    %c0_30 = arith.constant 0 : index
    %c8_31 = arith.constant 8 : index
    %37 = vector.load %arg6[%c0_29, %c0_30, %c8_31] : memref<1x8x32xbf16, #tpu.memory_space<vmem>>, vector<1x8x8xbf16>
    %38 = vector.shape_cast %37 : vector<1x8x8xbf16> to vector<8x8xbf16>
    %cst_32 = arith.constant dense<0.000000e+00> : vector<8x8xf32>
    %39 = tpu.matmul %34, %36, %cst_32 {dimension_numbers = #tpu.dot_dimension_numbers<[1], [1], [0], [0], [0, 0, 1, 0], [], []>} : vector<8x8xbf16>, vector<8x8xbf16>, vector<8x8xf32> -> vector<8x8xf32>
    %c0_33 = arith.constant 0 : index
    %c1 = arith.constant 1 : index
    %40 = vector.load %arg8[%c0_33, %c1] : memref<8x4xf32, #tpu.memory_space<vmem>>, vector<8x1xf32>
    %cst_34 = arith.constant dense<0xFF800000> : vector<8xf32>
    %41 = vector.multi_reduction <maximumf>, %39, %cst_34 [1] : vector<8x8xf32> to vector<8xf32>
    %42 = vector.shape_cast %41 : vector<8xf32> to vector<8x1xf32>
    %43 = arith.maximumf %40, %42 : vector<8x1xf32>
    %44 = arith.subf %40, %43 : vector<8x1xf32>
    %45 = math.exp %44 : vector<8x1xf32>
    %46 = vector.broadcast %43 : vector<8x1xf32> to vector<8x8xf32>
    %47 = arith.subf %39, %46 : vector<8x8xf32>
    %48 = math.exp %47 : vector<8x8xf32>
    %c0_35 = arith.constant 0 : index
    %c1_36 = arith.constant 1 : index
    %49 = vector.load %arg9[%c0_35, %c1_36] : memref<8x4xf32, #tpu.memory_space<vmem>>, vector<8x1xf32>
    %50 = arith.mulf %45, %49 : vector<8x1xf32>
    %cst_37 = arith.constant dense<0.000000e+00> : vector<8xf32>
    %51 = vector.multi_reduction <add>, %48, %cst_37 [1] : vector<8x8xf32> to vector<8xf32>
    %52 = vector.shape_cast %51 : vector<8xf32> to vector<8x1xf32>
    %53 = arith.addf %50, %52 : vector<8x1xf32>
    %c0_38 = arith.constant 0 : index
    %c1_39 = arith.constant 1 : index
    %54 = vector.load %arg9[%c0_38, %c1_39] : memref<8x4xf32, #tpu.memory_space<vmem>>, vector<8x1xf32>
    tpu.vector_store %arg9[%c0_38, %c1_39], %53 {strides = array<i32>} : memref<8x4xf32, #tpu.memory_space<vmem>>, vector<8x1xf32>,
    %c0_40 = arith.constant 0 : index
    %c8_41 = arith.constant 8 : index
    %55 = vector.load %arg10[%c0_40, %c8_41] : memref<8x32xf32, #tpu.memory_space<vmem>>, vector<8x8xf32>
    %56 = vector.broadcast %45 : vector<8x1xf32> to vector<8x8xf32>
    %57 = arith.mulf %56, %55 : vector<8x8xf32>
    %58 = arith.truncf %48 : vector<8x8xf32> to vector<8x8xbf16>
    %cst_42 = arith.constant dense<0.000000e+00> : vector<8x8xf32>
    %59 = tpu.matmul %58, %38, %cst_42 {dimension_numbers = #tpu.dot_dimension_numbers<[1], [0], [0], [1], [0, 0, 1, 1], [], []>} : vector<8x8xbf16>, vector<8x8xbf16>, vector<8x8xf32> -> vector<8x8xf32>
    %60 = arith.addf %57, %59 : vector<8x8xf32>
    %c0_43 = arith.constant 0 : index
    %c8_44 = arith.constant 8 : index
    %61 = vector.load %arg10[%c0_43, %c8_44] : memref<8x32xf32, #tpu.memory_space<vmem>>, vector<8x8xf32>
    tpu.vector_store %arg10[%c0_43, %c8_44], %60 {strides = array<i32>} : memref<8x32xf32, #tpu.memory_space<vmem>>, vector<8x8xf32>,
    %c0_45 = arith.constant 0 : index
    %c1_46 = arith.constant 1 : index
    %62 = vector.load %arg8[%c0_45, %c1_46] : memref<8x4xf32, #tpu.memory_space<vmem>>, vector<8x1xf32>
    tpu.vector_store %arg8[%c0_45, %c1_46], %43 {strides = array<i32>} : memref<8x4xf32, #tpu.memory_space<vmem>>, vector<8x1xf32>,
    %c0_47 = arith.constant 0 : index
    %c0_48 = arith.constant 0 : index
    %c16 = arith.constant 16 : index
    %63 = vector.load %arg4[%c0_47, %c0_48, %c16] : memref<1x8x32xbf16, #tpu.memory_space<vmem>>, vector<1x8x8xbf16>
    %64 = vector.shape_cast %63 : vector<1x8x8xbf16> to vector<8x8xbf16>
    %c0_49 = arith.constant 0 : index
    %c0_50 = arith.constant 0 : index
    %c16_51 = arith.constant 16 : index
    %65 = vector.load %arg5[%c0_49, %c0_50, %c16_51] : memref<1x8x32xbf16, #tpu.memory_space<vmem>>, vector<1x8x8xbf16>
    %66 = vector.shape_cast %65 : vector<1x8x8xbf16> to vector<8x8xbf16>
    %c0_52 = arith.constant 0 : index
    %c0_53 = arith.constant 0 : index
    %c16_54 = arith.constant 16 : index
    %67 = vector.load %arg6[%c0_52, %c0_53, %c16_54] : memref<1x8x32xbf16, #tpu.memory_space<vmem>>, vector<1x8x8xbf16>
    %68 = vector.shape_cast %67 : vector<1x8x8xbf16> to vector<8x8xbf16>
    %cst_55 = arith.constant dense<0.000000e+00> : vector<8x8xf32>
    %69 = tpu.matmul %64, %66, %cst_55 {dimension_numbers = #tpu.dot_dimension_numbers<[1], [1], [0], [0], [0, 0, 1, 0], [], []>} : vector<8x8xbf16>, vector<8x8xbf16>, vector<8x8xf32> -> vector<8x8xf32>
    %c0_56 = arith.constant 0 : index
    %c2 = arith.constant 2 : index
    %70 = vector.load %arg8[%c0_56, %c2] : memref<8x4xf32, #tpu.memory_space<vmem>>, vector<8x1xf32>
    %cst_57 = arith.constant dense<0xFF800000> : vector<8xf32>
    %71 = vector.multi_reduction <maximumf>, %69, %cst_57 [1] : vector<8x8xf32> to vector<8xf32>
    %72 = vector.shape_cast %71 : vector<8xf32> to vector<8x1xf32>
    %73 = arith.maximumf %70, %72 : vector<8x1xf32>
    %74 = arith.subf %70, %73 : vector<8x1xf32>
    %75 = math.exp %74 : vector<8x1xf32>
    %76 = vector.broadcast %73 : vector<8x1xf32> to vector<8x8xf32>
    %77 = arith.subf %69, %76 : vector<8x8xf32>
    %78 = math.exp %77 : vector<8x8xf32>
    %c0_58 = arith.constant 0 : index
    %c2_59 = arith.constant 2 : index
    %79 = vector.load %arg9[%c0_58, %c2_59] : memref<8x4xf32, #tpu.memory_space<vmem>>, vector<8x1xf32>
    %80 = arith.mulf %75, %79 : vector<8x1xf32>
    %cst_60 = arith.constant dense<0.000000e+00> : vector<8xf32>
    %81 = vector.multi_reduction <add>, %78, %cst_60 [1] : vector<8x8xf32> to vector<8xf32>
    %82 = vector.shape_cast %81 : vector<8xf32> to vector<8x1xf32>
    %83 = arith.addf %80, %82 : vector<8x1xf32>
    %c0_61 = arith.constant 0 : index
    %c2_62 = arith.constant 2 : index
    %84 = vector.load %arg9[%c0_61, %c2_62] : memref<8x4xf32, #tpu.memory_space<vmem>>, vector<8x1xf32>
    tpu.vector_store %arg9[%c0_61, %c2_62], %83 {strides = array<i32>} : memref<8x4xf32, #tpu.memory_space<vmem>>, vector<8x1xf32>,
    %c0_63 = arith.constant 0 : index
    %c16_64 = arith.constant 16 : index
    %85 = vector.load %arg10[%c0_63, %c16_64] : memref<8x32xf32, #tpu.memory_space<vmem>>, vector<8x8xf32>
    %86 = vector.broadcast %75 : vector<8x1xf32> to vector<8x8xf32>
    %87 = arith.mulf %86, %85 : vector<8x8xf32>
    %88 = arith.truncf %78 : vector<8x8xf32> to vector<8x8xbf16>
    %cst_65 = arith.constant dense<0.000000e+00> : vector<8x8xf32>
    %89 = tpu.matmul %88, %68, %cst_65 {dimension_numbers = #tpu.dot_dimension_numbers<[1], [0], [0], [1], [0, 0, 1, 1], [], []>} : vector<8x8xbf16>, vector<8x8xbf16>, vector<8x8xf32> -> vector<8x8xf32>
    %90 = arith.addf %87, %89 : vector<8x8xf32>
    %c0_66 = arith.constant 0 : index
    %c16_67 = arith.constant 16 : index
    %91 = vector.load %arg10[%c0_66, %c16_67] : memref<8x32xf32, #tpu.memory_space<vmem>>, vector<8x8xf32>
    tpu.vector_store %arg10[%c0_66, %c16_67], %90 {strides = array<i32>} : memref<8x32xf32, #tpu.memory_space<vmem>>, vector<8x8xf32>,
    %c0_68 = arith.constant 0 : index
    %c2_69 = arith.constant 2 : index
    %92 = vector.load %arg8[%c0_68, %c2_69] : memref<8x4xf32, #tpu.memory_space<vmem>>, vector<8x1xf32>
    tpu.vector_store %arg8[%c0_68, %c2_69], %73 {strides = array<i32>} : memref<8x4xf32, #tpu.memory_space<vmem>>, vector<8x1xf32>,
    %c0_70 = arith.constant 0 : index
    %c0_71 = arith.constant 0 : index
    %c24 = arith.constant 24 : index
    %93 = vector.load %arg4[%c0_70, %c0_71, %c24] : memref<1x8x32xbf16, #tpu.memory_space<vmem>>, vector<1x8x8xbf16>
    %94 = vector.shape_cast %93 : vector<1x8x8xbf16> to vector<8x8xbf16>
    %c0_72 = arith.constant 0 : index
    %c0_73 = arith.constant 0 : index
    %c24_74 = arith.constant 24 : index
    %95 = vector.load %arg5[%c0_72, %c0_73, %c24_74] : memref<1x8x32xbf16, #tpu.memory_space<vmem>>, vector<1x8x8xbf16>
    %96 = vector.shape_cast %95 : vector<1x8x8xbf16> to vector<8x8xbf16>
    %c0_75 = arith.constant 0 : index
    %c0_76 = arith.constant 0 : index
    %c24_77 = arith.constant 24 : index
    %97 = vector.load %arg6[%c0_75, %c0_76, %c24_77] : memref<1x8x32xbf16, #tpu.memory_space<vmem>>, vector<1x8x8xbf16>
    %98 = vector.shape_cast %97 : vector<1x8x8xbf16> to vector<8x8xbf16>
    %cst_78 = arith.constant dense<0.000000e+00> : vector<8x8xf32>
    %99 = tpu.matmul %94, %96, %cst_78 {dimension_numbers = #tpu.dot_dimension_numbers<[1], [1], [0], [0], [0, 0, 1, 0], [], []>} : vector<8x8xbf16>, vector<8x8xbf16>, vector<8x8xf32> -> vector<8x8xf32>
    %c0_79 = arith.constant 0 : index
    %c3 = arith.constant 3 : index
    %100 = vector.load %arg8[%c0_79, %c3] : memref<8x4xf32, #tpu.memory_space<vmem>>, vector<8x1xf32>
    %cst_80 = arith.constant dense<0xFF800000> : vector<8xf32>
    %101 = vector.multi_reduction <maximumf>, %99, %cst_80 [1] : vector<8x8xf32> to vector<8xf32>
    %102 = vector.shape_cast %101 : vector<8xf32> to vector<8x1xf32>
    %103 = arith.maximumf %100, %102 : vector<8x1xf32>
    %104 = arith.subf %100, %103 : vector<8x1xf32>
    %105 = math.exp %104 : vector<8x1xf32>
    %106 = vector.broadcast %103 : vector<8x1xf32> to vector<8x8xf32>
    %107 = arith.subf %99, %106 : vector<8x8xf32>
    %108 = math.exp %107 : vector<8x8xf32>
    %c0_81 = arith.constant 0 : index
    %c3_82 = arith.constant 3 : index
    %109 = vector.load %arg9[%c0_81, %c3_82] : memref<8x4xf32, #tpu.memory_space<vmem>>, vector<8x1xf32>
    %110 = arith.mulf %105, %109 : vector<8x1xf32>
    %cst_83 = arith.constant dense<0.000000e+00> : vector<8xf32>
    %111 = vector.multi_reduction <add>, %108, %cst_83 [1] : vector<8x8xf32> to vector<8xf32>
    %112 = vector.shape_cast %111 : vector<8xf32> to vector<8x1xf32>
    %113 = arith.addf %110, %112 : vector<8x1xf32>
    %c0_84 = arith.constant 0 : index
    %c3_85 = arith.constant 3 : index
    %114 = vector.load %arg9[%c0_84, %c3_85] : memref<8x4xf32, #tpu.memory_space<vmem>>, vector<8x1xf32>
    tpu.vector_store %arg9[%c0_84, %c3_85], %113 {strides = array<i32>} : memref<8x4xf32, #tpu.memory_space<vmem>>, vector<8x1xf32>,
    %c0_86 = arith.constant 0 : index
    %c24_87 = arith.constant 24 : index
    %115 = vector.load %arg10[%c0_86, %c24_87] : memref<8x32xf32, #tpu.memory_space<vmem>>, vector<8x8xf32>
    %116 = vector.broadcast %105 : vector<8x1xf32> to vector<8x8xf32>
    %117 = arith.mulf %116, %115 : vector<8x8xf32>
    %118 = arith.truncf %108 : vector<8x8xf32> to vector<8x8xbf16>
    %cst_88 = arith.constant dense<0.000000e+00> : vector<8x8xf32>
    %119 = tpu.matmul %118, %98, %cst_88 {dimension_numbers = #tpu.dot_dimension_numbers<[1], [0], [0], [1], [0, 0, 1, 1], [], []>} : vector<8x8xbf16>, vector<8x8xbf16>, vector<8x8xf32> -> vector<8x8xf32>
    %120 = arith.addf %117, %119 : vector<8x8xf32>
    %c0_89 = arith.constant 0 : index
    %c24_90 = arith.constant 24 : index
    %121 = vector.load %arg10[%c0_89, %c24_90] : memref<8x32xf32, #tpu.memory_space<vmem>>, vector<8x8xf32>
    tpu.vector_store %arg10[%c0_89, %c24_90], %120 {strides = array<i32>} : memref<8x32xf32, #tpu.memory_space<vmem>>, vector<8x8xf32>,
    %c0_91 = arith.constant 0 : index
    %c3_92 = arith.constant 3 : index
    %122 = vector.load %arg8[%c0_91, %c3_92] : memref<8x4xf32, #tpu.memory_space<vmem>>, vector<8x1xf32>
    tpu.vector_store %arg8[%c0_91, %c3_92], %103 {strides = array<i32>} : memref<8x4xf32, #tpu.memory_space<vmem>>, vector<8x1xf32>,
    %c0_i32_93 = arith.constant 0 : i32
    %123 = arith.cmpi eq, %arg3, %c0_i32_93 : i32
    %124 = arith.extui %123 : i1 to i32
    %c0_i32_94 = arith.constant 0 : i32
    %125 = arith.cmpi ne, %124, %c0_i32_94 : i32
    scf.if %125 {
      %c0_95 = arith.constant 0 : index
      %c0_96 = arith.constant 0 : index
      %126 = vector.load %arg9[%c0_95, %c0_96] : memref<8x4xf32, #tpu.memory_space<vmem>>, vector<8x1xf32>
      %127 = tpu.reciprocal %126 : vector<8x1xf32> -> vector<8x1xf32>
      %c0_97 = arith.constant 0 : index
      %c0_98 = arith.constant 0 : index
      %128 = vector.load %arg10[%c0_97, %c0_98] : memref<8x32xf32, #tpu.memory_space<vmem>>, vector<8x8xf32>
      %129 = vector.broadcast %127 : vector<8x1xf32> to vector<8x8xf32>
      %130 = arith.mulf %128, %129 : vector<8x8xf32>
      %131 = arith.truncf %130 : vector<8x8xf32> to vector<8x8xbf16>
      %c0_99 = arith.constant 0 : index
      %c0_100 = arith.constant 0 : index
      %c0_101 = arith.constant 0 : index
      %132 = vector.load %arg7[%c0_99, %c0_100, %c0_101] : memref<1x8x32xbf16, #tpu.memory_space<vmem>>, vector<1x8x8xbf16>
      %133 = vector.shape_cast %132 : vector<1x8x8xbf16> to vector<8x8xbf16>
      %134 = vector.shape_cast %131 : vector<8x8xbf16> to vector<1x8x8xbf16>
      tpu.vector_store %arg7[%c0_99, %c0_100, %c0_101], %134 {strides = array<i32>} : memref<1x8x32xbf16, #tpu.memory_space<vmem>>, vector<1x8x8xbf16>,
      %c0_102 = arith.constant 0 : index
      %c1_103 = arith.constant 1 : index
      %135 = vector.load %arg9[%c0_102, %c1_103] : memref<8x4xf32, #tpu.memory_space<vmem>>, vector<8x1xf32>
      %136 = tpu.reciprocal %135 : vector<8x1xf32> -> vector<8x1xf32>
      %c0_104 = arith.constant 0 : index
      %c8_105 = arith.constant 8 : index
      %137 = vector.load %arg10[%c0_104, %c8_105] : memref<8x32xf32, #tpu.memory_space<vmem>>, vector<8x8xf32>
      %138 = vector.broadcast %136 : vector<8x1xf32> to vector<8x8xf32>
      %139 = arith.mulf %137, %138 : vector<8x8xf32>
      %140 = arith.truncf %139 : vector<8x8xf32> to vector<8x8xbf16>
      %c0_106 = arith.constant 0 : index
      %c0_107 = arith.constant 0 : index
      %c8_108 = arith.constant 8 : index
      %141 = vector.load %arg7[%c0_106, %c0_107, %c8_108] : memref<1x8x32xbf16, #tpu.memory_space<vmem>>, vector<1x8x8xbf16>
      %142 = vector.shape_cast %141 : vector<1x8x8xbf16> to vector<8x8xbf16>
      %143 = vector.shape_cast %140 : vector<8x8xbf16> to vector<1x8x8xbf16>
      tpu.vector_store %arg7[%c0_106, %c0_107, %c8_108], %143 {strides = array<i32>} : memref<1x8x32xbf16, #tpu.memory_space<vmem>>, vector<1x8x8xbf16>,
      %c0_109 = arith.constant 0 : index
      %c2_110 = arith.constant 2 : index
      %144 = vector.load %arg9[%c0_109, %c2_110] : memref<8x4xf32, #tpu.memory_space<vmem>>, vector<8x1xf32>
      %145 = tpu.reciprocal %144 : vector<8x1xf32> -> vector<8x1xf32>
      %c0_111 = arith.constant 0 : index
      %c16_112 = arith.constant 16 : index
      %146 = vector.load %arg10[%c0_111, %c16_112] : memref<8x32xf32, #tpu.memory_space<vmem>>, vector<8x8xf32>
      %147 = vector.broadcast %145 : vector<8x1xf32> to vector<8x8xf32>
      %148 = arith.mulf %146, %147 : vector<8x8xf32>
      %149 = arith.truncf %148 : vector<8x8xf32> to vector<8x8xbf16>
      %c0_113 = arith.constant 0 : index
      %c0_114 = arith.constant 0 : index
      %c16_115 = arith.constant 16 : index
      %150 = vector.load %arg7[%c0_113, %c0_114, %c16_115] : memref<1x8x32xbf16, #tpu.memory_space<vmem>>, vector<1x8x8xbf16>
      %151 = vector.shape_cast %150 : vector<1x8x8xbf16> to vector<8x8xbf16>
      %152 = vector.shape_cast %149 : vector<8x8xbf16> to vector<1x8x8xbf16>
      tpu.vector_store %arg7[%c0_113, %c0_114, %c16_115], %152 {strides = array<i32>} : memref<1x8x32xbf16, #tpu.memory_space<vmem>>, vector<1x8x8xbf16>,
      %c0_116 = arith.constant 0 : index
      %c3_117 = arith.constant 3 : index
      %153 = vector.load %arg9[%c0_116, %c3_117] : memref<8x4xf32, #tpu.memory_space<vmem>>, vector<8x1xf32>
      %154 = tpu.reciprocal %153 : vector<8x1xf32> -> vector<8x1xf32>
      %c0_118 = arith.constant 0 : index
      %c24_119 = arith.constant 24 : index
      %155 = vector.load %arg10[%c0_118, %c24_119] : memref<8x32xf32, #tpu.memory_space<vmem>>, vector<8x8xf32>
      %156 = vector.broadcast %154 : vector<8x1xf32> to vector<8x8xf32>
      %157 = arith.mulf %155, %156 : vector<8x8xf32>
      %158 = arith.truncf %157 : vector<8x8xf32> to vector<8x8xbf16>
      %c0_120 = arith.constant 0 : index
      %c0_121 = arith.constant 0 : index
      %c24_122 = arith.constant 24 : index
      %159 = vector.load %arg7[%c0_120, %c0_121, %c24_122] : memref<1x8x32xbf16, #tpu.memory_space<vmem>>, vector<1x8x8xbf16>
      %160 = vector.shape_cast %159 : vector<1x8x8xbf16> to vector<8x8xbf16>
      %161 = vector.shape_cast %158 : vector<8x8xbf16> to vector<1x8x8xbf16>
      tpu.vector_store %arg7[%c0_120, %c0_121, %c24_122], %161 {strides = array<i32>} : memref<1x8x32xbf16, #tpu.memory_space<vmem>>, vector<1x8x8xbf16>,
    } else {
    }
    return
  }
  func.func @transform_0(%arg0: i32, %arg1: i32, %arg2: i32, %arg3: i32) -> (i32, i32, i32) {
    %c0_i32 = arith.constant 0 : i32
    return %arg0, %arg2, %arg1 : i32, i32, i32
  }
  func.func @transform_1(%arg0: i32, %arg1: i32, %arg2: i32, %arg3: i32) -> (i32, i32, i32) {
    %c0_i32 = arith.constant 0 : i32
    return %arg0, %arg3, %arg1 : i32, i32, i32
  }
  func.func @transform_2(%arg0: i32, %arg1: i32, %arg2: i32, %arg3: i32) -> (i32, i32, i32) {
    %c0_i32 = arith.constant 0 : i32
    return %arg0, %arg3, %arg1 : i32, i32, i32
  }
  func.func @transform_3(%arg0: i32, %arg1: i32, %arg2: i32, %arg3: i32) -> (i32, i32, i32) {
    %c0_i32 = arith.constant 0 : i32
    return %arg0, %arg2, %arg1 : i32, i32, i32
  }
}

module attributes {stable_mosaic.version = 11 : i64} {
  func.func @proj_mlp_kernel(%arg0: i32, %arg1: memref<16x32xf32, #tpu.memory_space<vmem>>, %arg2: memref<16x32xbf16, #tpu.memory_space<vmem>>, %arg3: memref<32x32xbf16, #tpu.memory_space<vmem>>, %arg4: memref<1x32xf32, #tpu.memory_space<vmem>>, %arg5: memref<1x32xf32, #tpu.memory_space<vmem>>, %arg6: memref<1x32xf32, #tpu.memory_space<vmem>>, %arg7: memref<32x64xbf16, #tpu.memory_space<vmem>>, %arg8: memref<1x64xf32, #tpu.memory_space<vmem>>, %arg9: memref<64x32xbf16, #tpu.memory_space<vmem>>, %arg10: memref<1x32xf32, #tpu.memory_space<vmem>>, %arg11: memref<16x32xf32, #tpu.memory_space<vmem>>) attributes {dimension_semantics = [#tpu.dimension_semantics<parallel>], iteration_bounds = array<i64: 1>, scalar_prefetch = 0 : i64, scratch_operands = 0 : i64, tpu.core_type = #tpu.core_type<tc>, window_params = [{transform_indices = @transform_0, window_bounds = array<i64: 16, 32>}, {transform_indices = @transform_1, window_bounds = array<i64: 16, 32>}, {pipeline_mode = #tpu.pipeline_mode<synchronous>, transform_indices = @transform_2, window_bounds = array<i64: 32, 32>}, {pipeline_mode = #tpu.pipeline_mode<synchronous>, transform_indices = @transform_3, window_bounds = array<i64: 1, 32>}, {pipeline_mode = #tpu.pipeline_mode<synchronous>, transform_indices = @transform_4, window_bounds = array<i64: 1, 32>}, {pipeline_mode = #tpu.pipeline_mode<synchronous>, transform_indices = @transform_5, window_bounds = array<i64: 1, 32>}, {pipeline_mode = #tpu.pipeline_mode<synchronous>, transform_indices = @transform_6, window_bounds = array<i64: 32, 64>}, {pipeline_mode = #tpu.pipeline_mode<synchronous>, transform_indices = @transform_7, window_bounds = array<i64: 1, 64>}, {pipeline_mode = #tpu.pipeline_mode<synchronous>, transform_indices = @transform_8, window_bounds = array<i64: 64, 32>}, {pipeline_mode = #tpu.pipeline_mode<synchronous>, transform_indices = @transform_9, window_bounds = array<i64: 1, 32>}, {transform_indices = @transform_10, window_bounds = array<i64: 16, 32>}]} {
    %c0 = arith.constant 0 : index
    %c0_0 = arith.constant 0 : index
    %0 = vector.load %arg2[%c0, %c0_0] : memref<16x32xbf16, #tpu.memory_space<vmem>>, vector<16x32xbf16>
    %c0_1 = arith.constant 0 : index
    %c0_2 = arith.constant 0 : index
    %1 = vector.load %arg3[%c0_1, %c0_2] : memref<32x32xbf16, #tpu.memory_space<vmem>>, vector<32x32xbf16>
    %cst = arith.constant dense<0.000000e+00> : vector<16x32xf32>
    %2 = tpu.matmul %0, %1, %cst {dimension_numbers = #tpu.dot_dimension_numbers<[1], [0], [0], [1], [0, 0, 1, 1], [], []>} : vector<16x32xbf16>, vector<32x32xbf16>, vector<16x32xf32> -> vector<16x32xf32>
    %c0_3 = arith.constant 0 : index
    %c0_4 = arith.constant 0 : index
    %3 = vector.load %arg4[%c0_3, %c0_4] : memref<1x32xf32, #tpu.memory_space<vmem>>, vector<1x32xf32>
    %4 = vector.broadcast %3 : vector<1x32xf32> to vector<16x32xf32>
    %5 = arith.addf %2, %4 : vector<16x32xf32>
    %c0_5 = arith.constant 0 : index
    %c0_6 = arith.constant 0 : index
    %6 = vector.load %arg1[%c0_5, %c0_6] : memref<16x32xf32, #tpu.memory_space<vmem>>, vector<16x32xf32>
    %7 = arith.addf %6, %5 : vector<16x32xf32>
    %c0_7 = arith.constant 0 : index
    %c0_8 = arith.constant 0 : index
    %8 = vector.load %arg5[%c0_7, %c0_8] : memref<1x32xf32, #tpu.memory_space<vmem>>, vector<1x32xf32>
    %c0_9 = arith.constant 0 : index
    %c0_10 = arith.constant 0 : index
    %9 = vector.load %arg6[%c0_9, %c0_10] : memref<1x32xf32, #tpu.memory_space<vmem>>, vector<1x32xf32>
    %cst_11 = arith.constant dense<0.000000e+00> : vector<16xf32>
    %10 = vector.multi_reduction <add>, %7, %cst_11 [1] : vector<16x32xf32> to vector<16xf32>
    %11 = vector.shape_cast %10 : vector<16xf32> to vector<16x1xf32>
    %cst_12 = arith.constant 3.200000e+01 : f32
    %12 = vector.broadcast %cst_12 : f32 to vector<16x1xf32>
    %13 = arith.divf %11, %12 : vector<16x1xf32>
    %14 = vector.broadcast %13 : vector<16x1xf32> to vector<16x32xf32>
    %15 = arith.subf %7, %14 : vector<16x32xf32>
    %16 = arith.mulf %15, %15 : vector<16x32xf32>
    %cst_13 = arith.constant dense<0.000000e+00> : vector<16xf32>
    %17 = vector.multi_reduction <add>, %16, %cst_13 [1] : vector<16x32xf32> to vector<16xf32>
    %18 = vector.shape_cast %17 : vector<16xf32> to vector<16x1xf32>
    %cst_14 = arith.constant 3.200000e+01 : f32
    %19 = vector.broadcast %cst_14 : f32 to vector<16x1xf32>
    %20 = arith.divf %18, %19 : vector<16x1xf32>
    %21 = vector.broadcast %13 : vector<16x1xf32> to vector<16x32xf32>
    %22 = arith.subf %7, %21 : vector<16x32xf32>
    %cst_15 = arith.constant 9.99999974E-6 : f32
    %23 = vector.broadcast %cst_15 : f32 to vector<16x1xf32>
    %24 = arith.addf %20, %23 : vector<16x1xf32>
    %25 = math.rsqrt %24 : vector<16x1xf32>
    %26 = vector.broadcast %25 : vector<16x1xf32> to vector<16x32xf32>
    %27 = arith.mulf %22, %26 : vector<16x32xf32>
    %28 = vector.broadcast %8 : vector<1x32xf32> to vector<16x32xf32>
    %29 = arith.mulf %27, %28 : vector<16x32xf32>
    %30 = vector.broadcast %9 : vector<1x32xf32> to vector<16x32xf32>
    %31 = arith.addf %29, %30 : vector<16x32xf32>
    %32 = arith.truncf %31 : vector<16x32xf32> to vector<16x32xbf16>
    %c0_16 = arith.constant 0 : index
    %c0_17 = arith.constant 0 : index
    %33 = vector.load %arg7[%c0_16, %c0_17] : memref<32x64xbf16, #tpu.memory_space<vmem>>, vector<32x64xbf16>
    %cst_18 = arith.constant dense<0.000000e+00> : vector<16x64xf32>
    %34 = tpu.matmul %32, %33, %cst_18 {dimension_numbers = #tpu.dot_dimension_numbers<[1], [0], [0], [1], [0, 0, 1, 1], [], []>} : vector<16x32xbf16>, vector<32x64xbf16>, vector<16x64xf32> -> vector<16x64xf32>
    %c0_19 = arith.constant 0 : index
    %c0_20 = arith.constant 0 : index
    %35 = vector.load %arg8[%c0_19, %c0_20] : memref<1x64xf32, #tpu.memory_space<vmem>>, vector<1x64xf32>
    %36 = vector.broadcast %35 : vector<1x64xf32> to vector<16x64xf32>
    %37 = arith.addf %34, %36 : vector<16x64xf32>
    %cst_21 = arith.constant 5.000000e-01 : f32
    %38 = vector.broadcast %cst_21 : f32 to vector<16x64xf32>
    %39 = arith.mulf %38, %37 : vector<16x64xf32>
    %cst_22 = arith.constant 0.707106769 : f32
    %40 = vector.broadcast %cst_22 : f32 to vector<16x64xf32>
    %41 = arith.mulf %37, %40 : vector<16x64xf32>
    %42 = math.erf %41 : vector<16x64xf32>
    %cst_23 = arith.constant 1.000000e+00 : f32
    %43 = vector.broadcast %cst_23 : f32 to vector<16x64xf32>
    %44 = arith.addf %43, %42 : vector<16x64xf32>
    %45 = arith.mulf %39, %44 : vector<16x64xf32>
    %46 = arith.truncf %45 : vector<16x64xf32> to vector<16x64xbf16>
    %c0_24 = arith.constant 0 : index
    %c0_25 = arith.constant 0 : index
    %47 = vector.load %arg9[%c0_24, %c0_25] : memref<64x32xbf16, #tpu.memory_space<vmem>>, vector<64x32xbf16>
    %cst_26 = arith.constant dense<0.000000e+00> : vector<16x32xf32>
    %48 = tpu.matmul %46, %47, %cst_26 {dimension_numbers = #tpu.dot_dimension_numbers<[1], [0], [0], [1], [0, 0, 1, 1], [], []>} : vector<16x64xbf16>, vector<64x32xbf16>, vector<16x32xf32> -> vector<16x32xf32>
    %c0_27 = arith.constant 0 : index
    %c0_28 = arith.constant 0 : index
    %49 = vector.load %arg10[%c0_27, %c0_28] : memref<1x32xf32, #tpu.memory_space<vmem>>, vector<1x32xf32>
    %50 = vector.broadcast %49 : vector<1x32xf32> to vector<16x32xf32>
    %51 = arith.addf %48, %50 : vector<16x32xf32>
    %52 = arith.addf %7, %51 : vector<16x32xf32>
    %c0_29 = arith.constant 0 : index
    %c0_30 = arith.constant 0 : index
    %53 = vector.load %arg11[%c0_29, %c0_30] : memref<16x32xf32, #tpu.memory_space<vmem>>, vector<16x32xf32>
    tpu.vector_store %arg11[%c0_29, %c0_30], %52 {strides = array<i32>} : memref<16x32xf32, #tpu.memory_space<vmem>>, vector<16x32xf32>,
    return
  }
  func.func @transform_0(%arg0: i32) -> (i32, i32) {
    %c0_i32 = arith.constant 0 : i32
    %c0_i32_0 = arith.constant 0 : i32
    return %arg0, %c0_i32 : i32, i32
  }
  func.func @transform_1(%arg0: i32) -> (i32, i32) {
    %c0_i32 = arith.constant 0 : i32
    %c0_i32_0 = arith.constant 0 : i32
    return %arg0, %c0_i32 : i32, i32
  }
  func.func @transform_2(%arg0: i32) -> (i32, i32) {
    %c0_i32 = arith.constant 0 : i32
    %c0_i32_0 = arith.constant 0 : i32
    %c0_i32_1 = arith.constant 0 : i32
    return %c0_i32, %c0_i32_0 : i32, i32
  }
  func.func @transform_3(%arg0: i32) -> (i32, i32) {
    %c0_i32 = arith.constant 0 : i32
    %c0_i32_0 = arith.constant 0 : i32
    %c0_i32_1 = arith.constant 0 : i32
    return %c0_i32, %c0_i32_0 : i32, i32
  }
  func.func @transform_4(%arg0: i32) -> (i32, i32) {
    %c0_i32 = arith.constant 0 : i32
    %c0_i32_0 = arith.constant 0 : i32
    %c0_i32_1 = arith.constant 0 : i32
    return %c0_i32, %c0_i32_0 : i32, i32
  }
  func.func @transform_5(%arg0: i32) -> (i32, i32) {
    %c0_i32 = arith.constant 0 : i32
    %c0_i32_0 = arith.constant 0 : i32
    %c0_i32_1 = arith.constant 0 : i32
    return %c0_i32, %c0_i32_0 : i32, i32
  }
  func.func @transform_6(%arg0: i32) -> (i32, i32) {
    %c0_i32 = arith.constant 0 : i32
    %c0_i32_0 = arith.constant 0 : i32
    %c0_i32_1 = arith.constant 0 : i32
    return %c0_i32, %c0_i32_0 : i32, i32
  }
  func.func @transform_7(%arg0: i32) -> (i32, i32) {
    %c0_i32 = arith.constant 0 : i32
    %c0_i32_0 = arith.constant 0 : i32
    %c0_i32_1 = arith.constant 0 : i32
    return %c0_i32, %c0_i32_0 : i32, i32
  }
  func.func @transform_8(%arg0: i32) -> (i32, i32) {
    %c0_i32 = arith.constant 0 : i32
    %c0_i32_0 = arith.constant 0 : i32
    %c0_i32_1 = arith.constant 0 : i32
    return %c0_i32, %c0_i32_0 : i32, i32
  }
  func.func @transform_9(%arg0: i32) -> (i32, i32) {
    %c0_i32 = arith.constant 0 : i32
    %c0_i32_0 = arith.constant 0 : i32
    %c0_i32_1 = arith.constant 0 : i32
    return %c0_i32, %c0_i32_0 : i32, i32
  }
  func.func @transform_10(%arg0: i32) -> (i32, i32) {
    %c0_i32 = arith.constant 0 : i32
    %c0_i32_0 = arith.constant 0 : i32
    return %arg0, %c0_i32 : i32, i32
  }
}

</mosaic_0001>

<llo_original>
// kernel: mul.9
$region0: #{mul.9}
  #allocation0 [shape = 's32[1]{0}', space=sflag, size = 0x4, scoped, tag = 'scoped memory for mul.9']
  %s0 = inlined_call_operand.vmem [shape: f32[1,96], index: 0, kind: input, shape index: {}]
  %s1 = inlined_call_operand.vmem [shape: f32[1,96], index: 1, kind: input, shape index: {}]
  %s2 = inlined_call_operand.vmem [shape: f32[1,96], index: 2, kind: output, shape index: {}]
  %v3 = vld [vmem:[%s0] sm:$0x1]
  %v4 = vld [vmem:[%s1] sm:$0x1]
  %5 = xla_tuple %v3, %v4
  %6 = xla_tuple %5
  %v7 = vmul.f32 %v3, %v4
  %8 = xla_tuple %v7
  %9 = vst [vmem:[%s2] sm:$0x1] %v7

// kernel: transformer_encoder.3
$region0: #{transformer_encoder.3}
  #allocation0 [shape = 'u32[]', space=smem, size = 0x4, offset = 0x4, fixed_abs, tag = 'smem constant byte address 0x4 - core index']
  #allocation1 [shape = 'u32[144,128]{1,0:T(1,128)}', space=vmem, size = 0x12000, scoped, tag = 'internal scratch']
  %s0 = inlined_call_operand.vmem [shape: f32[16,32], index: 0, kind: input, shape index: {}]
  %s1 = inlined_call_operand.vmem [shape: f32[1,32], index: 1, kind: input, shape index: {}]
  %s2 = inlined_call_operand.vmem [shape: f32[1,32], index: 2, kind: input, shape index: {}]
  %s3 = inlined_call_operand.vmem [shape: bf16[32,96], index: 3, kind: input, shape index: {}]
  %s4 = inlined_call_operand.vmem [shape: f32[1,96], index: 4, kind: input, shape index: {}]
  %s5 = inlined_call_operand.vmem [shape: bf16[16,32], index: 5, kind: output, shape index: {0}]
  %s6 = inlined_call_operand.vmem [shape: bf16[16,32], index: 6, kind: output, shape index: {1}]
  %s7 = inlined_call_operand.vmem [shape: bf16[16,32], index: 7, kind: output, shape index: {2}]
  %8 = xla_tuple %s5, %s6, %s7
  %s9 = sld [smem:[#allocation0]]
  $region46: #{transformer_encoder.3} parent=0
    _
  %s11 = ssub.s32 1, %s9
  %s12 = scalar_select 0, %s11, %s9
  // Predicated region
  $region2: #{transformer_encoder.3} parent=0 // pred_check
    _
  $region3: #{transformer_encoder.3} parent=0 // pred_check_branch
    %14 = sbr.rel (0) target = $region5
  $region4: #{transformer_encoder.3} parent=0 // pred_region
    _
  $region5: #{transformer_encoder.3} parent=0 // pred_fallthru
    _
  // Predicated region
  $region6: #{transformer_encoder.3} parent=0 // pred_check
    _
  $region7: #{transformer_encoder.3} parent=0 // pred_check_branch
    %16 = sbr.rel (0) target = $region9
  $region8: #{transformer_encoder.3} parent=0 // pred_region
    _
  $region9: #{transformer_encoder.3} parent=0 // pred_fallthru
    _
  // Predicated region
  $region10: #{transformer_encoder.3} parent=0 // pred_check
    _
  $region11: #{transformer_encoder.3} parent=0 // pred_check_branch
    %18 = sbr.rel (0) target = $region13
  $region12: #{transformer_encoder.3} parent=0 // pred_region
    _
  $region13: #{transformer_encoder.3} parent=0 // pred_fallthru
    _
  // Predicated region
  $region14: #{transformer_encoder.3} parent=0 // pred_check
    _
  $region15: #{transformer_encoder.3} parent=0 // pred_check_branch
    %20 = sbr.rel (0) target = $region17
  $region16: #{transformer_encoder.3} parent=0 // pred_region
    _
  $region17: #{transformer_encoder.3} parent=0 // pred_fallthru
    _
  // Predicated region
  $region18: #{transformer_encoder.3} parent=0 // pred_check
    _
  $region19: #{transformer_encoder.3} parent=0 // pred_check_branch
    %22 = sbr.rel (0) target = $region21
  $region20: #{transformer_encoder.3} parent=0 // pred_region
    _
  $region21: #{transformer_encoder.3} parent=0 // pred_fallthru
    _
  %v24 = vld [vmem:[%s0] sm:$0xff]
  %v25 = vld [vmem:[%s0 + $0x8] sm:$0xff]
  %v26 = vld [vmem:[%s1] sm:$0x1]
  %v27 = vld [vmem:[%s2] sm:$0x1]
  %vm28 = vcmask 261120
  %v29 = vsel %vm28, %v24, 0.0
  %30 = vadd.xlane.f32.xlu0 %v29
  %v31 = vpop.xlane.xlu0 %30
  %v32 = vsel %vm28, %v25, 0.0
  %33 = vadd.xlane.f32.xlu0 %v32
  %v34 = vpop.xlane.xlu0 %33
  %v35 = vrcp.pop 32.0
  %v36 = vmul.f32 %v31, %v35
  %v37 = vmul.f32 %v34, %v35
  %v38 = vsub.f32 %v24, %v36
  %v39 = vsub.f32 %v25, %v37
  %v40 = vmul.f32 %v38, %v38
  %v41 = vmul.f32 %v39, %v39
  %v42 = vsel %vm28, %v40, 0.0
  %43 = vadd.xlane.f32.xlu0 %v42
  %v44 = vpop.xlane.xlu0 %43
  %v45 = vsel %vm28, %v41, 0.0
  %46 = vadd.xlane.f32.xlu0 %v45
  %v47 = vpop.xlane.xlu0 %46
  %v48 = vmul.f32 %v44, %v35
  %v49 = vmul.f32 %v47, %v35
  %v50 = vadd.f32 %v48, 1e-05
  %v51 = vadd.f32 %v49, 1e-05
  %v52 = vrsqrt.pop %v50
  %v53 = vrsqrt.pop %v51
  %v54 = vmul.f32 %v38, %v52
  %v55 = vmul.f32 %v39, %v53
  %v57 = vlaneseq
  %v58 = vshrl.u32 %v57, 7
  %v59 = vsub.s32 0, %v58
  %v60 = vrot.slane %v26, %v59
  %v62 = vmul.f32 %v54, %v60
  %v63 = vmul.f32 %v55, %v60
  %v65 = vlaneseq
  %v66 = vshrl.u32 %v65, 7
  %v67 = vsub.s32 0, %v66
  %v68 = vrot.slane %v27, %v67
  %v70 = vadd.f32 %v62, %v68
  %v71 = vadd.f32 %v63, %v68
  %v72 = vpack.c.bf16 %v71, %v70
  %v73 = vld [vmem:[%s3] sm:$0xf]
  %v74 = vld [vmem:[%s3 + $0x4] sm:$0xf]
  %v75 = vld [vmem:[%s3 + $0x8] sm:$0xf]
  %v76 = vld [vmem:[%s3 + $0xc] sm:$0xf]
  %v77 = vld [vmem:[%s4] sm:$0x1]
  %v79 = vlaneseq
  %v80 = vshrl.u32 %v79, 7
  %v81 = vsub.s32 0, %v80
  %v82 = vrot.slane %v77, %v81
  %v88 = vunpack.c.l.b16 %v73
  %v89 = vunpack.c.l.b16 %v74
  %v90 = vunpack.c.l.b16 %v75
  %v91 = vunpack.c.l.b16 %v76
  %v92 = vpack.c.b16 %v89, %v88
  %v93 = vpack.c.b16 %v91, %v90
  %v97 = vsel %vm28, %v72, 0
  %99 = vmatprep.subr.bf16.mxu0 0
  %100 = vmatpush1.bf16.msra.mxu0 %v92
  %101 = vmatprep.subr.bf16.mxu0 0
  %102 = vmatpush1.bf16.msra.mxu0 %v93
  %103 = vmatprep.subr.bf16.mxu0 0
  %104 = vmatpush1.bf16.msra.mxu0 0
  %105 = vmatprep.subr.bf16.mxu0 0
  %106 = vmatpush1.bf16.msra.mxu0 0
  %107 = vmatprep.subr.bf16.mxu0 0
  %108 = vmatpush1.bf16.msra.mxu0 0
  %109 = vmatprep.subr.bf16.mxu0 0
  %110 = vmatpush1.bf16.msra.mxu0 0
  %111 = vmatprep.subr.bf16.mxu0 0
  %112 = vmatpush1.bf16.msra.mxu0 0
  %113 = vmatprep.subr.bf16.mxu0 0
  %114 = vmatpush1.bf16.msra.mxu0 0
  %115 = vmatprep.subr.bf16.mxu0 0
  %116 = vmatpush1.bf16.msra.mxu0 0
  %117 = vmatprep.subr.bf16.mxu0 0
  %118 = vmatpush1.bf16.msra.mxu0 0
  %119 = vmatprep.subr.bf16.mxu0 0
  %120 = vmatpush1.bf16.msra.mxu0 0
  %121 = vmatprep.subr.bf16.mxu0 0
  %122 = vmatpush1.bf16.msra.mxu0 0
  %123 = vmatprep.subr.bf16.mxu0 0
  %124 = vmatpush1.bf16.msra.mxu0 0
  %125 = vmatprep.subr.bf16.mxu0 0
  %126 = vmatpush1.bf16.msra.mxu0 0
  %127 = vmatprep.subr.bf16.mxu0 0
  %128 = vmatpush1.bf16.msra.mxu0 0
  %129 = vmatprep.subr.bf16.mxu0 0
  %130 = vmatpush1.bf16.msra.mxu0 0
  %131 = vmatprep.mubr.bf16.mxu0 0
  %132 = vmatmul.mubr.bf16.gmra.mrb[0].mxu0 %v97
  %v133 = vpop.f32.mrb[0].mxu0
  %v134 = vadd.f32 %v82, %v133
  %v135 = vpop.f32.mrb[0].mxu0
  %v136 = vpop.f32.mrb[0].mxu0
  %v137 = vadd.f32 %v82, %v136
  %v138 = vpop.f32.mrb[0].mxu0
  %139 = vdwg.mxu0
  %v140 = vpack.c.bf16 %v137, %v134
  %v142 = vunpack.c.l.b16 %v140
  %v143 = vunpack.c.h.b16 %v140
  %v144 = vpack.c.b16 %v142, %v142
  %v145 = vpack.c.b16 %v143, %v143
  %vm148 = vcmask 257024
  %149 = vst.msk [vmem:[%s5] sm:$0xf] %vm148, %v144
  %150 = vst.msk [vmem:[%s5 + $0x4] sm:$0xf] %vm148, %v145
  %151 = vrot.lane.b32.xlu0 %v144, 96
  %v152 = vpop.permute.xlu0 %151
  %153 = vrot.lane.b32.xlu0 %v145, 96
  %v154 = vpop.permute.xlu0 %153
  %157 = vst.msk [vmem:[%s6] sm:$0xf] %vm148, %v152
  %158 = vst.msk [vmem:[%s6 + $0x4] sm:$0xf] %vm148, %v154
  %159 = vrot.lane.b32.xlu0 %v144, 64
  %v160 = vpop.permute.xlu0 %159
  %161 = vrot.lane.b32.xlu0 %v145, 64
  %v162 = vpop.permute.xlu0 %161
  %165 = vst.msk [vmem:[%s7] sm:$0xf] %vm148, %v160
  %166 = vst.msk [vmem:[%s7 + $0x4] sm:$0xf] %vm148, %v162
  // Predicated region
  $region22: #{transformer_encoder.3} parent=0 // pred_check
    _
  $region23: #{transformer_encoder.3} parent=0 // pred_check_branch
    %168 = sbr.rel (0) target = $region25
  $region24: #{transformer_encoder.3} parent=0 // pred_region
    _
  $region25: #{transformer_encoder.3} parent=0 // pred_fallthru
    _
  // Predicated region
  $region26: #{transformer_encoder.3} parent=0 // pred_check
    _
  $region27: #{transformer_encoder.3} parent=0 // pred_check_branch
    %170 = sbr.rel (0) target = $region29
  $region28: #{transformer_encoder.3} parent=0 // pred_region
    _
  $region29: #{transformer_encoder.3} parent=0 // pred_fallthru
    _
  // Predicated region
  $region30: #{transformer_encoder.3} parent=0 // pred_check
    _
  $region31: #{transformer_encoder.3} parent=0 // pred_check_branch
    %172 = sbr.rel (0) target = $region33
  $region32: #{transformer_encoder.3} parent=0 // pred_region
    _
  $region33: #{transformer_encoder.3} parent=0 // pred_fallthru
    _
  // Predicated region
  $region34: #{transformer_encoder.3} parent=0 // pred_check
    _
  $region35: #{transformer_encoder.3} parent=0 // pred_check_branch
    %174 = sbr.rel (0) target = $region37
  $region36: #{transformer_encoder.3} parent=0 // pred_region
    _
  $region37: #{transformer_encoder.3} parent=0 // pred_fallthru
    _
  // Predicated region
  $region38: #{transformer_encoder.3} parent=0 // pred_check
    _
  $region39: #{transformer_encoder.3} parent=0 // pred_check_branch
    %176 = sbr.rel (0) target = $region41
  $region40: #{transformer_encoder.3} parent=0 // pred_region
    _
  $region41: #{transformer_encoder.3} parent=0 // pred_fallthru
    _
  // Predicated region
  $region42: #{transformer_encoder.3} parent=0 // pred_check
    _
  $region43: #{transformer_encoder.3} parent=0 // pred_check_branch
    %178 = sbr.rel (0) target = $region45
  $region44: #{transformer_encoder.3} parent=0 // pred_region
    _
  $region45: #{transformer_encoder.3} parent=0 // pred_fallthru
    _

// kernel: transformer_encoder.4
$region0: #{transformer_encoder.4}
  #allocation0 [shape = 'u32[]', space=smem, size = 0x4, offset = 0x4, fixed_abs, tag = 'smem constant byte address 0x4 - core index']
  #allocation1 [shape = 'u32[144,128]{1,0:T(1,128)}', space=vmem, size = 0x12000, scoped, tag = 'internal scratch']
  #allocation2 [shape = 'f32[8,4]{1,0:T(8,128)}', space=vmem, size = 0x1000, scoped, tag = 'scratch operand']
  #allocation3 [shape = 'f32[8,4]{1,0:T(8,128)}', space=vmem, size = 0x1000, scoped, tag = 'scratch operand']
  #allocation4 [shape = 'f32[8,32]{1,0:T(8,128)}', space=vmem, size = 0x1000, scoped, tag = 'scratch operand']
  %s0 = inlined_call_operand.vmem [shape: bf16[2,8,32], index: 0, kind: input, shape index: {}]
  %s1 = inlined_call_operand.vmem [shape: bf16[2,8,32], index: 1, kind: input, shape index: {}]
  %s2 = inlined_call_operand.vmem [shape: bf16[2,8,32], index: 2, kind: input, shape index: {}]
  %s3 = inlined_call_operand.vmem [shape: bf16[2,8,32], index: 3, kind: output, shape index: {}]
  %s4 = sld [smem:[#allocation0]]
  $region53: #{transformer_encoder.4} parent=0
    _
  %s6 = ssub.s32 1, %s4
  %s7 = scalar_select 0, %s6, %s4
  loop: start=0, step=1, limit=4
  $region2: #{transformer_encoder.4} parent=0 // loop_pre_header
    _
  $region3: #{transformer_encoder.4} parent=0 // loop_header
    %s9 = sphi 0, %s13
    %p10 = scmp.ge.s32.totalorder %s9, 4
    %s16 = sphi 0, %s42
    %s17 = sphi 0, %s38
    %s18 = sphi 0, %s34
    %s19 = sphi 0, %s30
    %s20 = sphi 0, %s16
    %s21 = sphi 0, %s17
    %s22 = sphi 0, %s18
    %s23 = sphi 0, %s19
    %s24 = sphi 0, %s20
    %s25 = sphi 0, %s21
    %s26 = sphi 0, %s22
    %s27 = sphi 0, %s23
    %s49 = sphi 0, %s51
    %s52 = sphi 0, %s49
    %s53 = sphi 0, %s52
    %s69 = sphi 0, %s53
    %s79 = sphi 0, %s81
    %s82 = sphi 0, %s79
    %s83 = sphi 0, %s82
    %s99 = sphi 0, %s83
    %s109 = sphi 0, %s111
    %s112 = sphi 0, %s109
    %s113 = sphi 0, %s112
    %s129 = sphi 0, %s113
    %s139 = sphi 0, %s141
    %s142 = sphi 0, %s139
    %s143 = sphi 0, %s142
    %s159 = sphi 0, %s143
  $region4: #{transformer_encoder.4} parent=0 // loop_header_branch
    %12 = sbr.rel (%p10) target = $region8
  $region5: #{transformer_encoder.4} parent=0 // loop_body
    %s14 = ssub.s32 %s9, 1
    %s15 = ssub.s32 %s9, 2
    %s28 = sadd.s32 1, %s19
    %p29 = scmp.ge.s32.totalorder %s28, 1
    %s30 = scalar_select %p29, 0, %s28
    %s31 = sadd.s32 1, %s18
    %s32 = scalar_select %p29, %s31, %s18
    %p33 = scmp.ge.s32.totalorder %s32, 1
    %s34 = scalar_select %p33, 0, %s32
    %s35 = sadd.s32 1, %s17
    %s36 = scalar_select %p33, %s35, %s17
    %p37 = scmp.ge.s32.totalorder %s36, 1
    %s38 = scalar_select %p37, 0, %s36
    %s39 = sadd.s32 1, %s16
    %s40 = scalar_select %p37, %s39, %s16
    %p41 = scmp.ge.s32.totalorder %s40, 2
    %s42 = scalar_select %p41, 0, %s40
    %s43 = ssub.s32 %s16, %s42
    %s44 = ssub.s32 %s18, %s34
    %s45 = sor.u32 %s43, %s44
    %s46 = ssub.s32 %s17, %s38
    %s47 = sor.u32 %s45, %s46
    %p48 = scmp.eq.s32.totalorder %s47, 0
    %s50 = sadd.s32 %s49, 1
    %s51 = scalar_select %p48, %s49, %s50
    %p54 = pneg %p48
    %p55 = scmp.eq.s32.totalorder %s9, 1
    %p56 = por %p54, %p55
    %p57 = scmp.ne.s32.totalorder %s49, %s52
    %p58 = scmp.eq.s32.totalorder %s9, 0
    %p59 = por %p57, %p58
    %p60 = scmp.ne.s32.totalorder %s49, %s52
    %p61 = scmp.eq.s32.totalorder %s14, 1
    %p62 = por %p60, %p61
    %p63 = scmp.ne.s32.totalorder %s52, %s53
    %p64 = scmp.eq.s32.totalorder %s14, 0
    %p65 = por %p63, %p64
    %p66 = scmp.ne.s32.totalorder %s52, %s53
    %p67 = scmp.eq.s32.totalorder %s15, 1
    %p68 = por %p66, %p67
    %p70 = scmp.ne.s32.totalorder %s53, %s69
    %p71 = scmp.eq.s32.totalorder %s15, 0
    %p72 = por %p70, %p71
    %s73 = ssub.s32 %s16, %s42
    %s74 = ssub.s32 %s19, %s30
    %s75 = sor.u32 %s73, %s74
    %s76 = ssub.s32 %s17, %s38
    %s77 = sor.u32 %s75, %s76
    %p78 = scmp.eq.s32.totalorder %s77, 0
    %s80 = sadd.s32 %s79, 1
    %s81 = scalar_select %p78, %s79, %s80
    %p84 = pneg %p78
    %p85 = scmp.eq.s32.totalorder %s9, 1
    %p86 = por %p84, %p85
    %p87 = scmp.ne.s32.totalorder %s79, %s82
    %p88 = scmp.eq.s32.totalorder %s9, 0
    %p89 = por %p87, %p88
    %p90 = scmp.ne.s32.totalorder %s79, %s82
    %p91 = scmp.eq.s32.totalorder %s14, 1
    %p92 = por %p90, %p91
    %p93 = scmp.ne.s32.totalorder %s82, %s83
    %p94 = scmp.eq.s32.totalorder %s14, 0
    %p95 = por %p93, %p94
    %p96 = scmp.ne.s32.totalorder %s82, %s83
    %p97 = scmp.eq.s32.totalorder %s15, 1
    %p98 = por %p96, %p97
    %p100 = scmp.ne.s32.totalorder %s83, %s99
    %p101 = scmp.eq.s32.totalorder %s15, 0
    %p102 = por %p100, %p101
    %s103 = ssub.s32 %s16, %s42
    %s104 = ssub.s32 %s19, %s30
    %s105 = sor.u32 %s103, %s104
    %s106 = ssub.s32 %s17, %s38
    %s107 = sor.u32 %s105, %s106
    %p108 = scmp.eq.s32.totalorder %s107, 0
    %s110 = sadd.s32 %s109, 1
    %s111 = scalar_select %p108, %s109, %s110
    %p114 = pneg %p108
    %p115 = scmp.eq.s32.totalorder %s9, 1
    %p116 = por %p114, %p115
    %p117 = scmp.ne.s32.totalorder %s109, %s112
    %p118 = scmp.eq.s32.totalorder %s9, 0
    %p119 = por %p117, %p118
    %p120 = scmp.ne.s32.totalorder %s109, %s112
    %p121 = scmp.eq.s32.totalorder %s14, 1
    %p122 = por %p120, %p121
    %p123 = scmp.ne.s32.totalorder %s112, %s113
    %p124 = scmp.eq.s32.totalorder %s14, 0
    %p125 = por %p123, %p124
    %p126 = scmp.ne.s32.totalorder %s112, %s113
    %p127 = scmp.eq.s32.totalorder %s15, 1
    %p128 = por %p126, %p127
    %p130 = scmp.ne.s32.totalorder %s113, %s129
    %p131 = scmp.eq.s32.totalorder %s15, 0
    %p132 = por %p130, %p131
    %s133 = ssub.s32 %s16, %s42
    %s134 = ssub.s32 %s18, %s34
    %s135 = sor.u32 %s133, %s134
    %s136 = ssub.s32 %s17, %s38
    %s137 = sor.u32 %s135, %s136
    %p138 = scmp.eq.s32.totalorder %s137, 0
    %s140 = sadd.s32 %s139, 1
    %s141 = scalar_select %p138, %s139, %s140
    %p144 = pneg %p138
    %p145 = scmp.eq.s32.totalorder %s9, 1
    %p146 = por %p144, %p145
    %p147 = scmp.ne.s32.totalorder %s139, %s142
    %p148 = scmp.eq.s32.totalorder %s9, 0
    %p149 = por %p147, %p148
    %p150 = scmp.ne.s32.totalorder %s139, %s142
    %p151 = scmp.eq.s32.totalorder %s14, 1
    %p152 = por %p150, %p151
    %p153 = scmp.ne.s32.totalorder %s142, %s143
    %p154 = scmp.eq.s32.totalorder %s14, 0
    %p155 = por %p153, %p154
    %p156 = scmp.ne.s32.totalorder %s142, %s143
    %p157 = scmp.eq.s32.totalorder %s15, 1
    %p158 = por %p156, %p157
    %p160 = scmp.ne.s32.totalorder %s143, %s159
    %p161 = scmp.eq.s32.totalorder %s15, 0
    %p162 = por %p160, %p161
    %p163 = scmp.le.s32.totalorder 1, %s9
    %p164 = scmp.lt.s32.totalorder %s9, 3
    %p165 = pnand %p163, %p164
    %p166 = pneg %p165
    // Predicated region
    $region9: #{transformer_encoder.4} parent=5 // pred_check
      _
    $region10: #{transformer_encoder.4} parent=5 // pred_check_branch
      %168 = sbr.rel (%p165) target = $region12
    $region11: #{transformer_encoder.4} parent=5 // pred_region
      %s169 = ssub.s32 %s9, 1
    $region12: #{transformer_encoder.4} parent=5 // pred_fallthru
      _
    %p170 = scmp.lt.s32.totalorder %s9, 2
    // Predicated region
    $region13: #{transformer_encoder.4} parent=5 // pred_check
      %p171 = pneg %p170
    $region14: #{transformer_encoder.4} parent=5 // pred_check_branch
      %173 = sbr.rel (%p171) target = $region16
    $region15: #{transformer_encoder.4} parent=5 // pred_region
      // Predicated region
      $region17: #{transformer_encoder.4} parent=15 // pred_check
        %p174 = pneg %p59
      $region18: #{transformer_encoder.4} parent=15 // pred_check_branch
        %176 = sbr.rel (%p174) target = $region20
      $region19: #{transformer_encoder.4} parent=15 // pred_region
        %p177 = scmp.lt.s32.totalorder %s16, 1
        %s178 = scalar_select %p177, %s16, 1
        %p179 = scmp.lt.s32.totalorder %s18, 0
        %s180 = scalar_select %p179, %s18, 0
        %p181 = scmp.lt.s32.totalorder %s17, 0
        %s182 = scalar_select %p181, %s17, 0
        %s183 = sadd.s32 %s182, %s180
        %s184 = sadd.s32 %s183, %s178
        %s185 = smul.addr %s184, 4
        %s186 = scalar_lea.vmem %s0, %s185
      $region20: #{transformer_encoder.4} parent=15 // pred_fallthru
        _
      // Predicated region
      $region21: #{transformer_encoder.4} parent=15 // pred_check
        %p187 = pneg %p89
      $region22: #{transformer_encoder.4} parent=15 // pred_check_branch
        %189 = sbr.rel (%p187) target = $region24
      $region23: #{transformer_encoder.4} parent=15 // pred_region
        %p190 = scmp.lt.s32.totalorder %s16, 1
        %s191 = scalar_select %p190, %s16, 1
        %p192 = scmp.lt.s32.totalorder %s19, 0
        %s193 = scalar_select %p192, %s19, 0
        %p194 = scmp.lt.s32.totalorder %s17, 0
        %s195 = scalar_select %p194, %s17, 0
        %s196 = sadd.s32 %s195, %s193
        %s197 = sadd.s32 %s196, %s191
        %s198 = smul.addr %s197, 4
        %s199 = scalar_lea.vmem %s1, %s198
      $region24: #{transformer_encoder.4} parent=15 // pred_fallthru
        _
      // Predicated region
      $region25: #{transformer_encoder.4} parent=15 // pred_check
        %p200 = pneg %p119
      $region26: #{transformer_encoder.4} parent=15 // pred_check_branch
        %202 = sbr.rel (%p200) target = $region28
      $region27: #{transformer_encoder.4} parent=15 // pred_region
        %p203 = scmp.lt.s32.totalorder %s16, 1
        %s204 = scalar_select %p203, %s16, 1
        %p205 = scmp.lt.s32.totalorder %s19, 0
        %s206 = scalar_select %p205, %s19, 0
        %p207 = scmp.lt.s32.totalorder %s17, 0
        %s208 = scalar_select %p207, %s17, 0
        %s209 = sadd.s32 %s208, %s206
        %s210 = sadd.s32 %s209, %s204
        %s211 = smul.addr %s210, 4
        %s212 = scalar_lea.vmem %s2, %s211
      $region28: #{transformer_encoder.4} parent=15 // pred_fallthru
        _
    $region16: #{transformer_encoder.4} parent=5 // pred_fallthru
      _
    %p213 = scmp.le.s32.totalorder 1, %s9
    %p214 = scmp.lt.s32.totalorder %s9, 3
    %p215 = pnand %p213, %p214
    %p216 = pneg %p215
    // Predicated region
    $region29: #{transformer_encoder.4} parent=5 // pred_check
      _
    $region30: #{transformer_encoder.4} parent=5 // pred_check_branch
      %218 = sbr.rel (%p215) target = $region32
    $region31: #{transformer_encoder.4} parent=5 // pred_region
      %s219 = ssub.s32 %s9, 1
      %p220 = scmp.lt.s32.totalorder %s20, 1
      %s221 = scalar_select %p220, %s20, 1
      %p222 = scmp.lt.s32.totalorder %s22, 0
      %s223 = scalar_select %p222, %s22, 0
      %p224 = scmp.lt.s32.totalorder %s21, 0
      %s225 = scalar_select %p224, %s21, 0
      %s226 = sadd.s32 %s225, %s223
      %s227 = sadd.s32 %s226, %s221
      %s228 = smul.addr %s227, 4
      %s229 = scalar_lea.vmem %s0, %s228
      %p230 = pneg %p65
      %p231 = pneg %p62
      %p232 = scmp.lt.s32.totalorder %s20, 1
      %s233 = scalar_select %p232, %s20, 1
      %p234 = scmp.lt.s32.totalorder %s23, 0
      %s235 = scalar_select %p234, %s23, 0
      %p236 = scmp.lt.s32.totalorder %s21, 0
      %s237 = scalar_select %p236, %s21, 0
      %s238 = sadd.s32 %s237, %s235
      %s239 = sadd.s32 %s238, %s233
      %s240 = smul.addr %s239, 4
      %s241 = scalar_lea.vmem %s1, %s240
      %p242 = pneg %p95
      %p243 = pneg %p92
      %p244 = scmp.lt.s32.totalorder %s20, 1
      %s245 = scalar_select %p244, %s20, 1
      %p246 = scmp.lt.s32.totalorder %s23, 0
      %s247 = scalar_select %p246, %s23, 0
      %p248 = scmp.lt.s32.totalorder %s21, 0
      %s249 = scalar_select %p248, %s21, 0
      %s250 = sadd.s32 %s249, %s247
      %s251 = sadd.s32 %s250, %s245
      %s252 = smul.addr %s251, 4
      %s253 = scalar_lea.vmem %s2, %s252
      %p254 = pneg %p125
      %p255 = pneg %p122
      %p256 = pneg %p155
      %p257 = pneg %p152
      %p258 = scmp.lt.s32.totalorder %s20, 1
      %s259 = scalar_select %p258, %s20, 1
      %p260 = scmp.lt.s32.totalorder %s22, 0
      %s261 = scalar_select %p260, %s22, 0
      %p262 = scmp.lt.s32.totalorder %s21, 0
      %s263 = scalar_select %p262, %s21, 0
      %s264 = sadd.s32 %s263, %s261
      %s265 = sadd.s32 %s264, %s259
      %s266 = smul.addr %s265, 4
      %s267 = scalar_lea.vmem %s3, %s266
      %p268 = scmp.lt.s32.totalorder %s20, 1
      %s269 = scalar_select %p268, %s20, 1
      %p270 = scmp.lt.s32.totalorder %s22, 0
      %s271 = scalar_select %p270, %s22, 0
      %p272 = scmp.lt.s32.totalorder %s21, 0
      %s273 = scalar_select %p272, %s21, 0
      %s274 = sadd.s32 %s273, %s271
      %s275 = sadd.s32 %s274, %s269
      %s276 = smul.addr %s275, 4
      %s277 = scalar_lea.vmem %s0, %s276
      %p278 = scmp.lt.s32.totalorder %s20, 1
      %s279 = scalar_select %p278, %s20, 1
      %p280 = scmp.lt.s32.totalorder %s23, 0
      %s281 = scalar_select %p280, %s23, 0
      %p282 = scmp.lt.s32.totalorder %s21, 0
      %s283 = scalar_select %p282, %s21, 0
      %s284 = sadd.s32 %s283, %s281
      %s285 = sadd.s32 %s284, %s279
      %s286 = smul.addr %s285, 4
      %s287 = scalar_lea.vmem %s1, %s286
      %p288 = scmp.lt.s32.totalorder %s20, 1
      %s289 = scalar_select %p288, %s20, 1
      %p290 = scmp.lt.s32.totalorder %s23, 0
      %s291 = scalar_select %p290, %s23, 0
      %p292 = scmp.lt.s32.totalorder %s21, 0
      %s293 = scalar_select %p292, %s21, 0
      %s294 = sadd.s32 %s293, %s291
      %s295 = sadd.s32 %s294, %s289
      %s296 = smul.addr %s295, 4
      %s297 = scalar_lea.vmem %s2, %s296
      %p298 = scmp.lt.s32.totalorder %s20, 1
      %s299 = scalar_select %p298, %s20, 1
      %p300 = scmp.lt.s32.totalorder %s22, 0
      %s301 = scalar_select %p300, %s22, 0
      %p302 = scmp.lt.s32.totalorder %s21, 0
      %s303 = scalar_select %p302, %s21, 0
      %s304 = sadd.s32 %s303, %s301
      %s305 = sadd.s32 %s304, %s299
      %s306 = smul.addr %s305, 4
      %s307 = scalar_lea.vmem %s3, %s306
      %p309 = scmp.eq.s32.totalorder %s23, 0
      // Predicated region
      $region33: #{transformer_encoder.4} parent=31 // pred_check
        %p310 = pneg %p309
      $region34: #{transformer_encoder.4} parent=31 // pred_check_branch
        %312 = sbr.rel (%p310) target = $region36
      $region35: #{transformer_encoder.4} parent=31 // pred_region
        %vm313 = vcmask 31744
        %314 = vst.msk [vmem:[#allocation2] sm:$0xff] %vm313, -1e+30
        %315 = vst.msk [vmem:[#allocation3] sm:$0xff] %vm313, 0.0
        %vm316 = vcmask 261120
        %317 = vst.msk [vmem:[#allocation4] sm:$0xff] %vm316, 0.0
      $region36: #{transformer_encoder.4} parent=31 // pred_fallthru
        _
      %v318 = vld [vmem:[%s277] sm:$0xf]
      %v319 = vld [vmem:[%s287] sm:$0xf]
      %v320 = vld [vmem:[%s297] sm:$0xf]
      %vm321 = vcmask 64512
      %v323 = vsel %vm321, %v318, 0
      %v326 = vsel %vm321, %v319, 0
      %328 = vmatprep.subr.bf16.mxu0 0
      %329 = vmatpush1.bf16.xpose.msra.mxu0 %v326
      %330 = vmatprep.subr.bf16.mxu0 0
      %331 = vmatpush1.bf16.xpose.msra.mxu0 0
      %332 = vmatprep.subr.bf16.mxu0 0
      %333 = vmatpush1.bf16.xpose.msra.mxu0 0
      %334 = vmatprep.subr.bf16.mxu0 0
      %335 = vmatpush1.bf16.xpose.msra.mxu0 0
      %336 = vmatprep.subr.bf16.mxu0 0
      %337 = vmatpush1.bf16.xpose.msra.mxu0 0
      %338 = vmatprep.subr.bf16.mxu0 0
      %339 = vmatpush1.bf16.xpose.msra.mxu0 0
      %340 = vmatprep.subr.bf16.mxu0 0
      %341 = vmatpush1.bf16.xpose.msra.mxu0 0
      %342 = vmatprep.subr.bf16.mxu0 0
      %343 = vmatpush1.bf16.xpose.msra.mxu0 0
      %344 = vmatprep.subr.bf16.mxu0 0
      %345 = vmatpush1.bf16.xpose.msra.mxu0 0
      %346 = vmatprep.subr.bf16.mxu0 0
      %347 = vmatpush1.bf16.xpose.msra.mxu0 0
      %348 = vmatprep.subr.bf16.mxu0 0
      %349 = vmatpush1.bf16.xpose.msra.mxu0 0
      %350 = vmatprep.subr.bf16.mxu0 0
      %351 = vmatpush1.bf16.xpose.msra.mxu0 0
      %352 = vmatprep.subr.bf16.mxu0 0
      %353 = vmatpush1.bf16.xpose.msra.mxu0 0
      %354 = vmatprep.subr.bf16.mxu0 0
      %355 = vmatpush1.bf16.xpose.msra.mxu0 0
      %356 = vmatprep.subr.bf16.mxu0 0
      %357 = vmatpush1.bf16.xpose.msra.mxu0 0
      %358 = vmatprep.subr.bf16.mxu0 0
      %359 = vmatpush1.bf16.xpose.msra.mxu0 0
      %360 = vmatprep.mubr.bf16.mxu0 0
      %361 = vmatmul.mubr.bf16.gmra.mrb[0].mxu0 %v323
      %v362 = vpop.f32.mrb[0].mxu0
      %v363 = vadd.f32 0.0, %v362
      %v364 = vpop.f32.mrb[0].mxu0
      %v365 = vpop.f32.mrb[0].mxu0
      %v366 = vpop.f32.mrb[0].mxu0
      %367 = vdwg.mxu0
      %v368 = vld [vmem:[#allocation2] sm:$0xff]
      %v369 = vsel %vm321, %v363, -inf
      %370 = vmax.xlane.f32.xlu0 %v369
      %v371 = vpop.xlane.xlu0 %370
      %v372 = vmax.f32 %v368, %v371
      %v373 = vsub.f32 %v368, %v372
      %v374 = vmul.f32 %v373, 1.442695
      %v375 = vpow.pop %v374
      %377 = vset.pattern.permute.xlu0 0
      %378 = vperm.xlu0 %377, %v372
      %v379 = vpop.permute.xlu0 %378
      %v381 = vsub.f32 %v363, %v379
      %v382 = vmul.f32 %v381, 1.442695
      %v383 = vpow.pop %v382
      %v384 = vld [vmem:[#allocation3] sm:$0xff]
      %v385 = vmul.f32 %v375, %v384
      %v386 = vsel %vm321, %v383, 0.0
      %387 = vadd.xlane.f32.xlu0 %v386
      %v388 = vpop.xlane.xlu0 %387
      %v389 = vadd.f32 %v385, %v388
      %vm390 = vcmask 7168
      %391 = vst.msk [vmem:[#allocation3] sm:$0xff] %vm390, %v389
      %v392 = vld [vmem:[#allocation4] sm:$0xff]
      %394 = vset.pattern.permute.xlu0 0
      %395 = vperm.xlu0 %394, %v375
      %v396 = vpop.permute.xlu0 %395
      %v398 = vmul.f32 %v396, %v392
      %v399 = vpack.c.bf16 %v383, %v383
      %v401 = vsel %vm321, %v399, 0
      %vm403 = vcmask 1043456
      %v405 = vsel %vm403, %v320, 0
      %407 = vmatprep.subr.bf16.mxu0 0
      %408 = vmatpush1.bf16.msra.mxu0 %v405
      %409 = vmatprep.subr.bf16.mxu0 0
      %410 = vmatpush1.bf16.msra.mxu0 0
      %411 = vmatprep.subr.bf16.mxu0 0
      %412 = vmatpush1.bf16.msra.mxu0 0
      %413 = vmatprep.subr.bf16.mxu0 0
      %414 = vmatpush1.bf16.msra.mxu0 0
      %415 = vmatprep.subr.bf16.mxu0 0
      %416 = vmatpush1.bf16.msra.mxu0 0
      %417 = vmatprep.subr.bf16.mxu0 0
      %418 = vmatpush1.bf16.msra.mxu0 0
      %419 = vmatprep.subr.bf16.mxu0 0
      %420 = vmatpush1.bf16.msra.mxu0 0
      %421 = vmatprep.subr.bf16.mxu0 0
      %422 = vmatpush1.bf16.msra.mxu0 0
      %423 = vmatprep.subr.bf16.mxu0 0
      %424 = vmatpush1.bf16.msra.mxu0 0
      %425 = vmatprep.subr.bf16.mxu0 0
      %426 = vmatpush1.bf16.msra.mxu0 0
      %427 = vmatprep.subr.bf16.mxu0 0
      %428 = vmatpush1.bf16.msra.mxu0 0
      %429 = vmatprep.subr.bf16.mxu0 0
      %430 = vmatpush1.bf16.msra.mxu0 0
      %431 = vmatprep.subr.bf16.mxu0 0
      %432 = vmatpush1.bf16.msra.mxu0 0
      %433 = vmatprep.subr.bf16.mxu0 0
      %434 = vmatpush1.bf16.msra.mxu0 0
      %435 = vmatprep.subr.bf16.mxu0 0
      %436 = vmatpush1.bf16.msra.mxu0 0
      %437 = vmatprep.subr.bf16.mxu0 0
      %438 = vmatpush1.bf16.msra.mxu0 0
      %439 = vmatprep.mubr.bf16.mxu0 0
      %440 = vmatmul.mubr.bf16.gmra.mrb[0].mxu0 %v401
      %v441 = vpop.f32.mrb[0].mxu0
      %v442 = vadd.f32 0.0, %v441
      %v443 = vpop.f32.mrb[0].mxu0
      %v444 = vpop.f32.mrb[0].mxu0
      %v445 = vpop.f32.mrb[0].mxu0
      %446 = vdwg.mxu0
      %v447 = vadd.f32 %v398, %v442
      %448 = vst.msk [vmem:[#allocation4] sm:$0xff] %vm321, %v447
      %449 = vst.msk [vmem:[#allocation2] sm:$0xff] %vm390, %v372
      %v450 = vld [vmem:[%s277] sm:$0xf]
      %v451 = vld [vmem:[%s287] sm:$0xf]
      %v452 = vld [vmem:[%s297] sm:$0xf]
      %v454 = vunpack.c.l.b16 %v450
      %v455 = vpack.c.b16 %v454, %v454
      %456 = vrot.lane.b32.xlu0 %v455, 120
      %v457 = vpop.permute.xlu0 %456
      %v459 = vunpack.c.l.b16 %v451
      %v460 = vpack.c.b16 %v459, %v459
      %461 = vrot.lane.b32.xlu0 %v460, 120
      %v462 = vpop.permute.xlu0 %461
      %v464 = vsel %vm321, %v457, 0
      %v467 = vsel %vm321, %v462, 0
      %469 = vmatprep.subr.bf16.mxu0 0
      %470 = vmatpush1.bf16.xpose.msra.mxu0 %v467
      %471 = vmatprep.subr.bf16.mxu0 0
      %472 = vmatpush1.bf16.xpose.msra.mxu0 0
      %473 = vmatprep.subr.bf16.mxu0 0
      %474 = vmatpush1.bf16.xpose.msra.mxu0 0
      %475 = vmatprep.subr.bf16.mxu0 0
      %476 = vmatpush1.bf16.xpose.msra.mxu0 0
      %477 = vmatprep.subr.bf16.mxu0 0
      %478 = vmatpush1.bf16.xpose.msra.mxu0 0
      %479 = vmatprep.subr.bf16.mxu0 0
      %480 = vmatpush1.bf16.xpose.msra.mxu0 0
      %481 = vmatprep.subr.bf16.mxu0 0
      %482 = vmatpush1.bf16.xpose.msra.mxu0 0
      %483 = vmatprep.subr.bf16.mxu0 0
      %484 = vmatpush1.bf16.xpose.msra.mxu0 0
      %485 = vmatprep.subr.bf16.mxu0 0
      %486 = vmatpush1.bf16.xpose.msra.mxu0 0
      %487 = vmatprep.subr.bf16.mxu0 0
      %488 = vmatpush1.bf16.xpose.msra.mxu0 0
      %489 = vmatprep.subr.bf16.mxu0 0
      %490 = vmatpush1.bf16.xpose.msra.mxu0 0
      %491 = vmatprep.subr.bf16.mxu0 0
      %492 = vmatpush1.bf16.xpose.msra.mxu0 0
      %493 = vmatprep.subr.bf16.mxu0 0
      %494 = vmatpush1.bf16.xpose.msra.mxu0 0
      %495 = vmatprep.subr.bf16.mxu0 0
      %496 = vmatpush1.bf16.xpose.msra.mxu0 0
      %497 = vmatprep.subr.bf16.mxu0 0
      %498 = vmatpush1.bf16.xpose.msra.mxu0 0
      %499 = vmatprep.subr.bf16.mxu0 0
      %500 = vmatpush1.bf16.xpose.msra.mxu0 0
      %501 = vmatprep.mubr.bf16.mxu0 0
      %502 = vmatmul.mubr.bf16.gmra.mrb[0].mxu0 %v464
      %v503 = vpop.f32.mrb[0].mxu0
      %v504 = vadd.f32 0.0, %v503
      %v505 = vpop.f32.mrb[0].mxu0
      %v506 = vpop.f32.mrb[0].mxu0
      %v507 = vpop.f32.mrb[0].mxu0
      %508 = vdwg.mxu0
      %v509 = vld [vmem:[#allocation2] sm:$0xff]
      %v510 = vsel %vm321, %v504, -inf
      %511 = vmax.xlane.f32.xlu0 %v510
      %v512 = vpop.xlane.xlu0 %511
      %v513 = vmax.f32 %v509, %v512
      %v514 = vsub.f32 %v509, %v513
      %v515 = vmul.f32 %v514, 1.442695
      %v516 = vpow.pop %v515
      %518 = vset.pattern.permute.xlu0 1
      %519 = vperm.xlu0 %518, %v513
      %v520 = vpop.permute.xlu0 %519
      %v522 = vsub.f32 %v504, %v520
      %v523 = vmul.f32 %v522, 1.442695
      %v524 = vpow.pop %v523
      %v525 = vld [vmem:[#allocation3] sm:$0xff]
      %v526 = vmul.f32 %v516, %v525
      %v527 = vsel %vm321, %v524, 0.0
      %528 = vadd.xlane.f32.xlu0 %v527
      %v529 = vpop.xlane.xlu0 %528
      %v530 = vadd.f32 %v526, %v529
      %vm531 = vcmask 15368
      %532 = vst.msk [vmem:[#allocation3] sm:$0xff] %vm531, %v530
      %v533 = vld [vmem:[#allocation4] sm:$0xff]
      %535 = vset.pattern.permute.xlu0 1
      %536 = vperm.xlu0 %535, %v516
      %v537 = vpop.permute.xlu0 %536
      %v539 = vmul.f32 %v537, %v533
      %v540 = vpack.c.bf16 %v524, %v524
      %v542 = vunpack.c.l.b16 %v452
      %v543 = vpack.c.b16 %v542, %v542
      %544 = vrot.lane.b32.xlu0 %v543, 120
      %v545 = vpop.permute.xlu0 %544
      %v547 = vsel %vm321, %v540, 0
      %v550 = vsel %vm403, %v545, 0
      %552 = vmatprep.subr.bf16.mxu0 0
      %553 = vmatpush1.bf16.msra.mxu0 %v550
      %554 = vmatprep.subr.bf16.mxu0 0
      %555 = vmatpush1.bf16.msra.mxu0 0
      %556 = vmatprep.subr.bf16.mxu0 0
      %557 = vmatpush1.bf16.msra.mxu0 0
      %558 = vmatprep.subr.bf16.mxu0 0
      %559 = vmatpush1.bf16.msra.mxu0 0
      %560 = vmatprep.subr.bf16.mxu0 0
      %561 = vmatpush1.bf16.msra.mxu0 0
      %562 = vmatprep.subr.bf16.mxu0 0
      %563 = vmatpush1.bf16.msra.mxu0 0
      %564 = vmatprep.subr.bf16.mxu0 0
      %565 = vmatpush1.bf16.msra.mxu0 0
      %566 = vmatprep.subr.bf16.mxu0 0
      %567 = vmatpush1.bf16.msra.mxu0 0
      %568 = vmatprep.subr.bf16.mxu0 0
      %569 = vmatpush1.bf16.msra.mxu0 0
      %570 = vmatprep.subr.bf16.mxu0 0
      %571 = vmatpush1.bf16.msra.mxu0 0
      %572 = vmatprep.subr.bf16.mxu0 0
      %573 = vmatpush1.bf16.msra.mxu0 0
      %574 = vmatprep.subr.bf16.mxu0 0
      %575 = vmatpush1.bf16.msra.mxu0 0
      %576 = vmatprep.subr.bf16.mxu0 0
      %577 = vmatpush1.bf16.msra.mxu0 0
      %578 = vmatprep.subr.bf16.mxu0 0
      %579 = vmatpush1.bf16.msra.mxu0 0
      %580 = vmatprep.subr.bf16.mxu0 0
      %581 = vmatpush1.bf16.msra.mxu0 0
      %582 = vmatprep.subr.bf16.mxu0 0
      %583 = vmatpush1.bf16.msra.mxu0 0
      %584 = vmatprep.mubr.bf16.mxu0 0
      %585 = vmatmul.mubr.bf16.gmra.mrb[0].mxu0 %v547
      %v586 = vpop.f32.mrb[0].mxu0
      %v587 = vadd.f32 0.0, %v586
      %v588 = vpop.f32.mrb[0].mxu0
      %v589 = vpop.f32.mrb[0].mxu0
      %v590 = vpop.f32.mrb[0].mxu0
      %591 = vdwg.mxu0
      %593 = vrot.lane.b32.xlu0 %v587, 8
      %v594 = vpop.permute.xlu0 %593
      %v596 = vadd.f32 %v539, %v594
      %vm597 = vcmask 130112
      %598 = vst.msk [vmem:[#allocation4] sm:$0xff] %vm597, %v596
      %599 = vst.msk [vmem:[#allocation2] sm:$0xff] %vm531, %v513
      %v600 = vld [vmem:[%s277] sm:$0xf]
      %v601 = vld [vmem:[%s287] sm:$0xf]
      %v602 = vld [vmem:[%s297] sm:$0xf]
      %v604 = vunpack.c.l.b16 %v600
      %v605 = vpack.c.b16 %v604, %v604
      %606 = vrot.lane.b32.xlu0 %v605, 112
      %v607 = vpop.permute.xlu0 %606
      %v609 = vunpack.c.l.b16 %v601
      %v610 = vpack.c.b16 %v609, %v609
      %611 = vrot.lane.b32.xlu0 %v610, 112
      %v612 = vpop.permute.xlu0 %611
      %v614 = vsel %vm321, %v607, 0
      %v617 = vsel %vm321, %v612, 0
      %619 = vmatprep.subr.bf16.mxu0 0
      %620 = vmatpush1.bf16.xpose.msra.mxu0 %v617
      %621 = vmatprep.subr.bf16.mxu0 0
      %622 = vmatpush1.bf16.xpose.msra.mxu0 0
      %623 = vmatprep.subr.bf16.mxu0 0
      %624 = vmatpush1.bf16.xpose.msra.mxu0 0
      %625 = vmatprep.subr.bf16.mxu0 0
      %626 = vmatpush1.bf16.xpose.msra.mxu0 0
      %627 = vmatprep.subr.bf16.mxu0 0
      %628 = vmatpush1.bf16.xpose.msra.mxu0 0
      %629 = vmatprep.subr.bf16.mxu0 0
      %630 = vmatpush1.bf16.xpose.msra.mxu0 0
      %631 = vmatprep.subr.bf16.mxu0 0
      %632 = vmatpush1.bf16.xpose.msra.mxu0 0
      %633 = vmatprep.subr.bf16.mxu0 0
      %634 = vmatpush1.bf16.xpose.msra.mxu0 0
      %635 = vmatprep.subr.bf16.mxu0 0
      %636 = vmatpush1.bf16.xpose.msra.mxu0 0
      %637 = vmatprep.subr.bf16.mxu0 0
      %638 = vmatpush1.bf16.xpose.msra.mxu0 0
      %639 = vmatprep.subr.bf16.mxu0 0
      %640 = vmatpush1.bf16.xpose.msra.mxu0 0
      %641 = vmatprep.subr.bf16.mxu0 0
      %642 = vmatpush1.bf16.xpose.msra.mxu0 0
      %643 = vmatprep.subr.bf16.mxu0 0
      %644 = vmatpush1.bf16.xpose.msra.mxu0 0
      %645 = vmatprep.subr.bf16.mxu0 0
      %646 = vmatpush1.bf16.xpose.msra.mxu0 0
      %647 = vmatprep.subr.bf16.mxu0 0
      %648 = vmatpush1.bf16.xpose.msra.mxu0 0
      %649 = vmatprep.subr.bf16.mxu0 0
      %650 = vmatpush1.bf16.xpose.msra.mxu0 0
      %651 = vmatprep.mubr.bf16.mxu0 0
      %652 = vmatmul.mubr.bf16.gmra.mrb[0].mxu0 %v614
      %v653 = vpop.f32.mrb[0].mxu0
      %v654 = vadd.f32 0.0, %v653
      %v655 = vpop.f32.mrb[0].mxu0
      %v656 = vpop.f32.mrb[0].mxu0
      %v657 = vpop.f32.mrb[0].mxu0
      %658 = vdwg.mxu0
      %v659 = vld [vmem:[#allocation2] sm:$0xff]
      %v660 = vsel %vm321, %v654, -inf
      %661 = vmax.xlane.f32.xlu0 %v660
      %v662 = vpop.xlane.xlu0 %661
      %v663 = vmax.f32 %v659, %v662
      %v664 = vsub.f32 %v659, %v663
      %v665 = vmul.f32 %v664, 1.442695
      %v666 = vpow.pop %v665
      %668 = vset.pattern.permute.xlu0 2
      %669 = vperm.xlu0 %668, %v663
      %v670 = vpop.permute.xlu0 %669
      %v672 = vsub.f32 %v654, %v670
      %v673 = vmul.f32 %v672, 1.442695
      %v674 = vpow.pop %v673
      %v675 = vld [vmem:[#allocation3] sm:$0xff]
      %v676 = vmul.f32 %v666, %v675
      %v677 = vsel %vm321, %v674, 0.0
      %678 = vadd.xlane.f32.xlu0 %v677
      %v679 = vpop.xlane.xlu0 %678
      %v680 = vadd.f32 %v676, %v679
      %vm681 = vcmask 23568
      %682 = vst.msk [vmem:[#allocation3] sm:$0xff] %vm681, %v680
      %v683 = vld [vmem:[#allocation4] sm:$0xff]
      %685 = vset.pattern.permute.xlu0 2
      %686 = vperm.xlu0 %685, %v666
      %v687 = vpop.permute.xlu0 %686
      %v689 = vmul.f32 %v687, %v683
      %v690 = vpack.c.bf16 %v674, %v674
      %v692 = vunpack.c.l.b16 %v602
      %v693 = vpack.c.b16 %v692, %v692
      %694 = vrot.lane.b32.xlu0 %v693, 112
      %v695 = vpop.permute.xlu0 %694
      %v697 = vsel %vm321, %v690, 0
      %v700 = vsel %vm403, %v695, 0
      %702 = vmatprep.subr.bf16.mxu0 0
      %703 = vmatpush1.bf16.msra.mxu0 %v700
      %704 = vmatprep.subr.bf16.mxu0 0
      %705 = vmatpush1.bf16.msra.mxu0 0
      %706 = vmatprep.subr.bf16.mxu0 0
      %707 = vmatpush1.bf16.msra.mxu0 0
      %708 = vmatprep.subr.bf16.mxu0 0
      %709 = vmatpush1.bf16.msra.mxu0 0
      %710 = vmatprep.subr.bf16.mxu0 0
      %711 = vmatpush1.bf16.msra.mxu0 0
      %712 = vmatprep.subr.bf16.mxu0 0
      %713 = vmatpush1.bf16.msra.mxu0 0
      %714 = vmatprep.subr.bf16.mxu0 0
      %715 = vmatpush1.bf16.msra.mxu0 0
      %716 = vmatprep.subr.bf16.mxu0 0
      %717 = vmatpush1.bf16.msra.mxu0 0
      %718 = vmatprep.subr.bf16.mxu0 0
      %719 = vmatpush1.bf16.msra.mxu0 0
      %720 = vmatprep.subr.bf16.mxu0 0
      %721 = vmatpush1.bf16.msra.mxu0 0
      %722 = vmatprep.subr.bf16.mxu0 0
      %723 = vmatpush1.bf16.msra.mxu0 0
      %724 = vmatprep.subr.bf16.mxu0 0
      %725 = vmatpush1.bf16.msra.mxu0 0
      %726 = vmatprep.subr.bf16.mxu0 0
      %727 = vmatpush1.bf16.msra.mxu0 0
      %728 = vmatprep.subr.bf16.mxu0 0
      %729 = vmatpush1.bf16.msra.mxu0 0
      %730 = vmatprep.subr.bf16.mxu0 0
      %731 = vmatpush1.bf16.msra.mxu0 0
      %732 = vmatprep.subr.bf16.mxu0 0
      %733 = vmatpush1.bf16.msra.mxu0 0
      %734 = vmatprep.mubr.bf16.mxu0 0
      %735 = vmatmul.mubr.bf16.gmra.mrb[0].mxu0 %v697
      %v736 = vpop.f32.mrb[0].mxu0
      %v737 = vadd.f32 0.0, %v736
      %v738 = vpop.f32.mrb[0].mxu0
      %v739 = vpop.f32.mrb[0].mxu0
      %v740 = vpop.f32.mrb[0].mxu0
      %741 = vdwg.mxu0
      %743 = vrot.lane.b32.xlu0 %v737, 16
      %v744 = vpop.permute.xlu0 %743
      %v746 = vadd.f32 %v689, %v744
      %vm747 = vcmask 195712
      %748 = vst.msk [vmem:[#allocation4] sm:$0xff] %vm747, %v746
      %749 = vst.msk [vmem:[#allocation2] sm:$0xff] %vm681, %v663
      %v750 = vld [vmem:[%s277] sm:$0xf]
      %v751 = vld [vmem:[%s287] sm:$0xf]
      %v752 = vld [vmem:[%s297] sm:$0xf]
      %v754 = vunpack.c.l.b16 %v750
      %v755 = vpack.c.b16 %v754, %v754
      %756 = vrot.lane.b32.xlu0 %v755, 104
      %v757 = vpop.permute.xlu0 %756
      %v759 = vunpack.c.l.b16 %v751
      %v760 = vpack.c.b16 %v759, %v759
      %761 = vrot.lane.b32.xlu0 %v760, 104
      %v762 = vpop.permute.xlu0 %761
      %v764 = vsel %vm321, %v757, 0
      %v767 = vsel %vm321, %v762, 0
      %769 = vmatprep.subr.bf16.mxu0 0
      %770 = vmatpush1.bf16.xpose.msra.mxu0 %v767
      %771 = vmatprep.subr.bf16.mxu0 0
      %772 = vmatpush1.bf16.xpose.msra.mxu0 0
      %773 = vmatprep.subr.bf16.mxu0 0
      %774 = vmatpush1.bf16.xpose.msra.mxu0 0
      %775 = vmatprep.subr.bf16.mxu0 0
      %776 = vmatpush1.bf16.xpose.msra.mxu0 0
      %777 = vmatprep.subr.bf16.mxu0 0
      %778 = vmatpush1.bf16.xpose.msra.mxu0 0
      %779 = vmatprep.subr.bf16.mxu0 0
      %780 = vmatpush1.bf16.xpose.msra.mxu0 0
      %781 = vmatprep.subr.bf16.mxu0 0
      %782 = vmatpush1.bf16.xpose.msra.mxu0 0
      %783 = vmatprep.subr.bf16.mxu0 0
      %784 = vmatpush1.bf16.xpose.msra.mxu0 0
      %785 = vmatprep.subr.bf16.mxu0 0
      %786 = vmatpush1.bf16.xpose.msra.mxu0 0
      %787 = vmatprep.subr.bf16.mxu0 0
      %788 = vmatpush1.bf16.xpose.msra.mxu0 0
      %789 = vmatprep.subr.bf16.mxu0 0
      %790 = vmatpush1.bf16.xpose.msra.mxu0 0
      %791 = vmatprep.subr.bf16.mxu0 0
      %792 = vmatpush1.bf16.xpose.msra.mxu0 0
      %793 = vmatprep.subr.bf16.mxu0 0
      %794 = vmatpush1.bf16.xpose.msra.mxu0 0
      %795 = vmatprep.subr.bf16.mxu0 0
      %796 = vmatpush1.bf16.xpose.msra.mxu0 0
      %797 = vmatprep.subr.bf16.mxu0 0
      %798 = vmatpush1.bf16.xpose.msra.mxu0 0
      %799 = vmatprep.subr.bf16.mxu0 0
      %800 = vmatpush1.bf16.xpose.msra.mxu0 0
      %801 = vmatprep.mubr.bf16.mxu0 0
      %802 = vmatmul.mubr.bf16.gmra.mrb[0].mxu0 %v764
      %v803 = vpop.f32.mrb[0].mxu0
      %v804 = vadd.f32 0.0, %v803
      %v805 = vpop.f32.mrb[0].mxu0
      %v806 = vpop.f32.mrb[0].mxu0
      %v807 = vpop.f32.mrb[0].mxu0
      %808 = vdwg.mxu0
      %v809 = vld [vmem:[#allocation2] sm:$0xff]
      %v810 = vsel %vm321, %v804, -inf
      %811 = vmax.xlane.f32.xlu0 %v810
      %v812 = vpop.xlane.xlu0 %811
      %v813 = vmax.f32 %v809, %v812
      %v814 = vsub.f32 %v809, %v813
      %v815 = vmul.f32 %v814, 1.442695
      %v816 = vpow.pop %v815
      %818 = vset.pattern.permute.xlu0 3
      %819 = vperm.xlu0 %818, %v813
      %v820 = vpop.permute.xlu0 %819
      %v822 = vsub.f32 %v804, %v820
      %v823 = vmul.f32 %v822, 1.442695
      %v824 = vpow.pop %v823
      %v825 = vld [vmem:[#allocation3] sm:$0xff]
      %v826 = vmul.f32 %v816, %v825
      %v827 = vsel %vm321, %v824, 0.0
      %828 = vadd.xlane.f32.xlu0 %v827
      %v829 = vpop.xlane.xlu0 %828
      %v830 = vadd.f32 %v826, %v829
      %vm831 = vcmask 31768
      %832 = vst.msk [vmem:[#allocation3] sm:$0xff] %vm831, %v830
      %v833 = vld [vmem:[#allocation4] sm:$0xff]
      %835 = vset.pattern.permute.xlu0 3
      %836 = vperm.xlu0 %835, %v816
      %v837 = vpop.permute.xlu0 %836
      %v839 = vmul.f32 %v837, %v833
      %v840 = vpack.c.bf16 %v824, %v824
      %v842 = vunpack.c.l.b16 %v752
      %v843 = vpack.c.b16 %v842, %v842
      %844 = vrot.lane.b32.xlu0 %v843, 104
      %v845 = vpop.permute.xlu0 %844
      %v847 = vsel %vm321, %v840, 0
      %v850 = vsel %vm403, %v845, 0
      %852 = vmatprep.subr.bf16.mxu0 0
      %853 = vmatpush1.bf16.msra.mxu0 %v850
      %854 = vmatprep.subr.bf16.mxu0 0
      %855 = vmatpush1.bf16.msra.mxu0 0
      %856 = vmatprep.subr.bf16.mxu0 0
      %857 = vmatpush1.bf16.msra.mxu0 0
      %858 = vmatprep.subr.bf16.mxu0 0
      %859 = vmatpush1.bf16.msra.mxu0 0
      %860 = vmatprep.subr.bf16.mxu0 0
      %861 = vmatpush1.bf16.msra.mxu0 0
      %862 = vmatprep.subr.bf16.mxu0 0
      %863 = vmatpush1.bf16.msra.mxu0 0
      %864 = vmatprep.subr.bf16.mxu0 0
      %865 = vmatpush1.bf16.msra.mxu0 0
      %866 = vmatprep.subr.bf16.mxu0 0
      %867 = vmatpush1.bf16.msra.mxu0 0
      %868 = vmatprep.subr.bf16.mxu0 0
      %869 = vmatpush1.bf16.msra.mxu0 0
      %870 = vmatprep.subr.bf16.mxu0 0
      %871 = vmatpush1.bf16.msra.mxu0 0
      %872 = vmatprep.subr.bf16.mxu0 0
      %873 = vmatpush1.bf16.msra.mxu0 0
      %874 = vmatprep.subr.bf16.mxu0 0
      %875 = vmatpush1.bf16.msra.mxu0 0
      %876 = vmatprep.subr.bf16.mxu0 0
      %877 = vmatpush1.bf16.msra.mxu0 0
      %878 = vmatprep.subr.bf16.mxu0 0
      %879 = vmatpush1.bf16.msra.mxu0 0
      %880 = vmatprep.subr.bf16.mxu0 0
      %881 = vmatpush1.bf16.msra.mxu0 0
      %882 = vmatprep.subr.bf16.mxu0 0
      %883 = vmatpush1.bf16.msra.mxu0 0
      %884 = vmatprep.mubr.bf16.mxu0 0
      %885 = vmatmul.mubr.bf16.gmra.mrb[0].mxu0 %v847
      %v886 = vpop.f32.mrb[0].mxu0
      %v887 = vadd.f32 0.0, %v886
      %v888 = vpop.f32.mrb[0].mxu0
      %v889 = vpop.f32.mrb[0].mxu0
      %v890 = vpop.f32.mrb[0].mxu0
      %891 = vdwg.mxu0
      %893 = vrot.lane.b32.xlu0 %v887, 24
      %v894 = vpop.permute.xlu0 %893
      %v896 = vadd.f32 %v839, %v894
      %vm897 = vcmask 261312
      %898 = vst.msk [vmem:[#allocation4] sm:$0xff] %vm897, %v896
      %899 = vst.msk [vmem:[#allocation2] sm:$0xff] %vm831, %v813
      // Predicated region
      $region37: #{transformer_encoder.4} parent=31 // pred_check
        %p900 = pneg %p309
      $region38: #{transformer_encoder.4} parent=31 // pred_check_branch
        %902 = sbr.rel (%p900) target = $region40
      $region39: #{transformer_encoder.4} parent=31 // pred_region
        %v903 = vld [vmem:[#allocation3] sm:$0xff]
        %v904 = vrcp.pop %v903
        %v905 = vld [vmem:[#allocation4] sm:$0xff]
        %907 = vset.pattern.permute.xlu0 0
        %908 = vperm.xlu0 %907, %v904
        %v909 = vpop.permute.xlu0 %908
        %v911 = vmul.f32 %v905, %v909
        %v912 = vpack.c.bf16 %v911, %v911
        %vm913 = vcmask 60416
        %914 = vst.msk [vmem:[%s307] sm:$0xf] %vm913, %v912
        %v915 = vld [vmem:[#allocation3] sm:$0xff]
        %v916 = vrcp.pop %v915
        %v917 = vld [vmem:[#allocation4] sm:$0xff]
        %919 = vset.pattern.permute.xlu0 1
        %920 = vperm.xlu0 %919, %v916
        %v921 = vpop.permute.xlu0 %920
        %v923 = vmul.f32 %v917, %v921
        %v924 = vpack.c.bf16 %v923, %v923
        %vm925 = vcmask 126016
        %926 = vst.msk [vmem:[%s307] sm:$0xf] %vm925, %v924
        %v927 = vld [vmem:[#allocation3] sm:$0xff]
        %v928 = vrcp.pop %v927
        %v929 = vld [vmem:[#allocation4] sm:$0xff]
        %931 = vset.pattern.permute.xlu0 2
        %932 = vperm.xlu0 %931, %v928
        %v933 = vpop.permute.xlu0 %932
        %v935 = vmul.f32 %v929, %v933
        %v936 = vpack.c.bf16 %v935, %v935
        %vm937 = vcmask 191616
        %938 = vst.msk [vmem:[%s307] sm:$0xf] %vm937, %v936
        %v939 = vld [vmem:[#allocation3] sm:$0xff]
        %v940 = vrcp.pop %v939
        %v941 = vld [vmem:[#allocation4] sm:$0xff]
        %943 = vset.pattern.permute.xlu0 3
        %944 = vperm.xlu0 %943, %v940
        %v945 = vpop.permute.xlu0 %944
        %v947 = vmul.f32 %v941, %v945
        %v948 = vpack.c.bf16 %v947, %v947
        %vm949 = vcmask 257216
        %950 = vst.msk [vmem:[%s307] sm:$0xf] %vm949, %v948
      $region40: #{transformer_encoder.4} parent=31 // pred_fallthru
        _
      %p951 = scmp.lt.s32.totalorder %s20, 1
      %s952 = scalar_select %p951, %s20, 1
      %p953 = scmp.lt.s32.totalorder %s22, 0
      %s954 = scalar_select %p953, %s22, 0
      %p955 = scmp.lt.s32.totalorder %s21, 0
      %s956 = scalar_select %p955, %s21, 0
      %s957 = sadd.s32 %s956, %s954
      %s958 = sadd.s32 %s957, %s952
      %s959 = smul.addr %s958, 4
      %s960 = scalar_lea.vmem %s3, %s959
      // Predicated region
      $region41: #{transformer_encoder.4} parent=31 // pred_check
        %p961 = pneg %p152
      $region42: #{transformer_encoder.4} parent=31 // pred_check_branch
        %963 = sbr.rel (%p961) target = $region44
      $region43: #{transformer_encoder.4} parent=31 // pred_region
        _
      $region44: #{transformer_encoder.4} parent=31 // pred_fallthru
        _
    $region32: #{transformer_encoder.4} parent=5 // pred_fallthru
      _
    %p964 = scmp.le.s32.totalorder 2, %s9
    // Predicated region
    $region45: #{transformer_encoder.4} parent=5 // pred_check
      %p965 = pneg %p964
    $region46: #{transformer_encoder.4} parent=5 // pred_check_branch
      %967 = sbr.rel (%p965) target = $region48
    $region47: #{transformer_encoder.4} parent=5 // pred_region
      %s968 = ssub.s32 %s9, 2
      // Predicated region
      $region49: #{transformer_encoder.4} parent=47 // pred_check
        %p969 = pneg %p158
      $region50: #{transformer_encoder.4} parent=47 // pred_check_branch
        %971 = sbr.rel (%p969) target = $region52
      $region51: #{transformer_encoder.4} parent=47 // pred_region
        %p972 = scmp.lt.s32.totalorder %s24, 1
        %s973 = scalar_select %p972, %s24, 1
        %p974 = scmp.lt.s32.totalorder %s26, 0
        %s975 = scalar_select %p974, %s26, 0
        %p976 = scmp.lt.s32.totalorder %s25, 0
        %s977 = scalar_select %p976, %s25, 0
        %s978 = sadd.s32 %s977, %s975
        %s979 = sadd.s32 %s978, %s973
        %s980 = smul.addr %s979, 4
        %s981 = scalar_lea.vmem %s3, %s980
      $region52: #{transformer_encoder.4} parent=47 // pred_fallthru
        _
    $region48: #{transformer_encoder.4} parent=5 // pred_fallthru
      _
  $region6: #{transformer_encoder.4} parent=0 // loop_footer
    %s13 = sadd.s32 1, %s9
  $region7: #{transformer_encoder.4} parent=0 // loop_footer_branch
    %8 = sbr.rel target = $region3
  $region8: #{transformer_encoder.4} parent=0 // loop_exit
    _

// kernel: transformer_encoder.5
$region0: #{transformer_encoder.5}
  #allocation0 [shape = 'u32[]', space=smem, size = 0x4, offset = 0x4, fixed_abs, tag = 'smem constant byte address 0x4 - core index']
  #allocation1 [shape = 'u32[144,128]{1,0:T(1,128)}', space=vmem, size = 0x12000, scoped, tag = 'internal scratch']
  %s0 = inlined_call_operand.vmem [shape: f32[16,32], index: 0, kind: input, shape index: {}]
  %s1 = inlined_call_operand.vmem [shape: bf16[16,32], index: 1, kind: input, shape index: {}]
  %s2 = inlined_call_operand.vmem [shape: bf16[32,32], index: 2, kind: input, shape index: {}]
  %s3 = inlined_call_operand.vmem [shape: f32[1,32], index: 3, kind: input, shape index: {}]
  %s4 = inlined_call_operand.vmem [shape: f32[1,32], index: 4, kind: input, shape index: {}]
  %s5 = inlined_call_operand.vmem [shape: f32[1,32], index: 5, kind: input, shape index: {}]
  %s6 = inlined_call_operand.vmem [shape: bf16[32,64], index: 6, kind: input, shape index: {}]
  %s7 = inlined_call_operand.vmem [shape: f32[1,64], index: 7, kind: input, shape index: {}]
  %s8 = inlined_call_operand.vmem [shape: bf16[64,32], index: 8, kind: input, shape index: {}]
  %s9 = inlined_call_operand.vmem [shape: f32[1,32], index: 9, kind: input, shape index: {}]
  %s10 = inlined_call_operand.hbm [shape: f32[16,32], index: 10, kind: output, shape index: {}]
  %s11 = sld [smem:[#allocation0]]
  $region50: #{transformer_encoder.5} parent=0
    _
  %s13 = ssub.s32 1, %s11
  %s14 = scalar_select 0, %s13, %s11
  $region1: #{transformer_encoder.5} parent=0
    #allocation2 [shape = 'u8[8192]{0}', space=vmem, size = 0x2000, scoped, tag = 'output window, operand 0, single buffered']
    #allocation3 [shape = 's32[1]{0}', space=sflag, size = 0x4, scoped, tag = 'scoped memory for transformer_encoder.5']
    %15 = vsyncpa [#allocation3], 0
    // Predicated region
    $region2: #{transformer_encoder.5} parent=1 // pred_check
      _
    $region3: #{transformer_encoder.5} parent=1 // pred_check_branch
      %17 = sbr.rel (0) target = $region5
    $region4: #{transformer_encoder.5} parent=1 // pred_region
      _
    $region5: #{transformer_encoder.5} parent=1 // pred_fallthru
      _
    // Predicated region
    $region6: #{transformer_encoder.5} parent=1 // pred_check
      _
    $region7: #{transformer_encoder.5} parent=1 // pred_check_branch
      %19 = sbr.rel (0) target = $region9
    $region8: #{transformer_encoder.5} parent=1 // pred_region
      _
    $region9: #{transformer_encoder.5} parent=1 // pred_fallthru
      _
    // Predicated region
    $region10: #{transformer_encoder.5} parent=1 // pred_check
      _
    $region11: #{transformer_encoder.5} parent=1 // pred_check_branch
      %21 = sbr.rel (0) target = $region13
    $region12: #{transformer_encoder.5} parent=1 // pred_region
      _
    $region13: #{transformer_encoder.5} parent=1 // pred_fallthru
      _
    // Predicated region
    $region14: #{transformer_encoder.5} parent=1 // pred_check
      _
    $region15: #{transformer_encoder.5} parent=1 // pred_check_branch
      %23 = sbr.rel (0) target = $region17
    $region16: #{transformer_encoder.5} parent=1 // pred_region
      _
    $region17: #{transformer_encoder.5} parent=1 // pred_fallthru
      _
    // Predicated region
    $region18: #{transformer_encoder.5} parent=1 // pred_check
      _
    $region19: #{transformer_encoder.5} parent=1 // pred_check_branch
      %25 = sbr.rel (0) target = $region21
    $region20: #{transformer_encoder.5} parent=1 // pred_region
      _
    $region21: #{transformer_encoder.5} parent=1 // pred_fallthru
      _
    // Predicated region
    $region22: #{transformer_encoder.5} parent=1 // pred_check
      _
    $region23: #{transformer_encoder.5} parent=1 // pred_check_branch
      %27 = sbr.rel (0) target = $region25
    $region24: #{transformer_encoder.5} parent=1 // pred_region
      _
    $region25: #{transformer_encoder.5} parent=1 // pred_fallthru
      _
    // Predicated region
    $region26: #{transformer_encoder.5} parent=1 // pred_check
      _
    $region27: #{transformer_encoder.5} parent=1 // pred_check_branch
      %29 = sbr.rel (0) target = $region29
    $region28: #{transformer_encoder.5} parent=1 // pred_region
      _
    $region29: #{transformer_encoder.5} parent=1 // pred_fallthru
      _
    // Predicated region
    $region30: #{transformer_encoder.5} parent=1 // pred_check
      _
    $region31: #{transformer_encoder.5} parent=1 // pred_check_branch
      %31 = sbr.rel (0) target = $region33
    $region32: #{transformer_encoder.5} parent=1 // pred_region
      _
    $region33: #{transformer_encoder.5} parent=1 // pred_fallthru
      _
    // Predicated region
    $region34: #{transformer_encoder.5} parent=1 // pred_check
      _
    $region35: #{transformer_encoder.5} parent=1 // pred_check_branch
      %33 = sbr.rel (0) target = $region37
    $region36: #{transformer_encoder.5} parent=1 // pred_region
      _
    $region37: #{transformer_encoder.5} parent=1 // pred_fallthru
      _
    // Predicated region
    $region38: #{transformer_encoder.5} parent=1 // pred_check
      _
    $region39: #{transformer_encoder.5} parent=1 // pred_check_branch
      %35 = sbr.rel (0) target = $region41
    $region40: #{transformer_encoder.5} parent=1 // pred_region
      _
    $region41: #{transformer_encoder.5} parent=1 // pred_fallthru
      _
    %v37 = vld [vmem:[%s1] sm:$0xf]
    %v38 = vld [vmem:[%s1 + $0x4] sm:$0xf]
    %v39 = vld [vmem:[%s2] sm:$0xf]
    %v40 = vld [vmem:[%s2 + $0x4] sm:$0xf]
    %v41 = vld [vmem:[%s2 + $0x8] sm:$0xf]
    %v42 = vld [vmem:[%s2 + $0xc] sm:$0xf]
    %v43 = vld [vmem:[%s3] sm:$0x1]
    %v45 = vlaneseq
    %v46 = vshrl.u32 %v45, 7
    %v47 = vsub.s32 0, %v46
    %v48 = vrot.slane %v43, %v47
    %v52 = vunpack.c.l.b16 %v37
    %v53 = vunpack.c.l.b16 %v38
    %v54 = vpack.c.b16 %v53, %v52
    %v59 = vunpack.c.l.b16 %v39
    %v60 = vunpack.c.l.b16 %v40
    %v61 = vunpack.c.l.b16 %v41
    %v62 = vunpack.c.l.b16 %v42
    %v63 = vpack.c.b16 %v60, %v59
    %v64 = vpack.c.b16 %v62, %v61
    %vm67 = vcmask 261120
    %v69 = vsel %vm67, %v54, 0
    %71 = vmatprep.subr.bf16.mxu0 0
    %72 = vmatpush1.bf16.msra.mxu0 %v63
    %73 = vmatprep.subr.bf16.mxu0 0
    %74 = vmatpush1.bf16.msra.mxu0 %v64
    %75 = vmatprep.subr.bf16.mxu0 0
    %76 = vmatpush1.bf16.msra.mxu0 0
    %77 = vmatprep.subr.bf16.mxu0 0
    %78 = vmatpush1.bf16.msra.mxu0 0
    %79 = vmatprep.subr.bf16.mxu0 0
    %80 = vmatpush1.bf16.msra.mxu0 0
    %81 = vmatprep.subr.bf16.mxu0 0
    %82 = vmatpush1.bf16.msra.mxu0 0
    %83 = vmatprep.subr.bf16.mxu0 0
    %84 = vmatpush1.bf16.msra.mxu0 0
    %85 = vmatprep.subr.bf16.mxu0 0
    %86 = vmatpush1.bf16.msra.mxu0 0
    %87 = vmatprep.subr.bf16.mxu0 0
    %88 = vmatpush1.bf16.msra.mxu0 0
    %89 = vmatprep.subr.bf16.mxu0 0
    %90 = vmatpush1.bf16.msra.mxu0 0
    %91 = vmatprep.subr.bf16.mxu0 0
    %92 = vmatpush1.bf16.msra.mxu0 0
    %93 = vmatprep.subr.bf16.mxu0 0
    %94 = vmatpush1.bf16.msra.mxu0 0
    %95 = vmatprep.subr.bf16.mxu0 0
    %96 = vmatpush1.bf16.msra.mxu0 0
    %97 = vmatprep.subr.bf16.mxu0 0
    %98 = vmatpush1.bf16.msra.mxu0 0
    %99 = vmatprep.subr.bf16.mxu0 0
    %100 = vmatpush1.bf16.msra.mxu0 0
    %101 = vmatprep.subr.bf16.mxu0 0
    %102 = vmatpush1.bf16.msra.mxu0 0
    %103 = vmatprep.mubr.bf16.mxu0 0
    %104 = vmatmul.mubr.bf16.gmra.mrb[0].mxu0 %v69
    %v105 = vpop.f32.mrb[0].mxu0
    %v106 = vadd.f32 %v48, %v105
    %v107 = vpop.f32.mrb[0].mxu0
    %v108 = vpop.f32.mrb[0].mxu0
    %v109 = vadd.f32 %v48, %v108
    %v110 = vpop.f32.mrb[0].mxu0
    %111 = vdwg.mxu0
    %v112 = vld [vmem:[%s0] sm:$0xff]
    %v113 = vld [vmem:[%s0 + $0x8] sm:$0xff]
    %v114 = vadd.f32 %v112, %v106
    %v115 = vadd.f32 %v113, %v109
    %v116 = vld [vmem:[%s4] sm:$0x1]
    %v117 = vld [vmem:[%s5] sm:$0x1]
    %v118 = vsel %vm67, %v114, 0.0
    %119 = vadd.xlane.f32.xlu0 %v118
    %v120 = vpop.xlane.xlu0 %119
    %v121 = vsel %vm67, %v115, 0.0
    %122 = vadd.xlane.f32.xlu0 %v121
    %v123 = vpop.xlane.xlu0 %122
    %v124 = vrcp.pop 32.0
    %v125 = vmul.f32 %v120, %v124
    %v126 = vmul.f32 %v123, %v124
    %v127 = vsub.f32 %v114, %v125
    %v128 = vsub.f32 %v115, %v126
    %v129 = vmul.f32 %v127, %v127
    %v130 = vmul.f32 %v128, %v128
    %v131 = vsel %vm67, %v129, 0.0
    %132 = vadd.xlane.f32.xlu0 %v131
    %v133 = vpop.xlane.xlu0 %132
    %v134 = vsel %vm67, %v130, 0.0
    %135 = vadd.xlane.f32.xlu0 %v134
    %v136 = vpop.xlane.xlu0 %135
    %v137 = vmul.f32 %v133, %v124
    %v138 = vmul.f32 %v136, %v124
    %v139 = vadd.f32 %v137, 1e-05
    %v140 = vadd.f32 %v138, 1e-05
    %v141 = vrsqrt.pop %v139
    %v142 = vrsqrt.pop %v140
    %v143 = vmul.f32 %v127, %v141
    %v144 = vmul.f32 %v128, %v142
    %v146 = vlaneseq
    %v147 = vshrl.u32 %v146, 7
    %v148 = vsub.s32 0, %v147
    %v149 = vrot.slane %v116, %v148
    %v151 = vmul.f32 %v143, %v149
    %v152 = vmul.f32 %v144, %v149
    %v154 = vlaneseq
    %v155 = vshrl.u32 %v154, 7
    %v156 = vsub.s32 0, %v155
    %v157 = vrot.slane %v117, %v156
    %v159 = vadd.f32 %v151, %v157
    %v160 = vadd.f32 %v152, %v157
    %v161 = vpack.c.bf16 %v160, %v159
    %v162 = vld [vmem:[%s6] sm:$0xf]
    %v163 = vld [vmem:[%s6 + $0x4] sm:$0xf]
    %v164 = vld [vmem:[%s6 + $0x8] sm:$0xf]
    %v165 = vld [vmem:[%s6 + $0xc] sm:$0xf]
    %v166 = vld [vmem:[%s7] sm:$0x1]
    %v168 = vlaneseq
    %v169 = vshrl.u32 %v168, 7
    %v170 = vsub.s32 0, %v169
    %v171 = vrot.slane %v166, %v170
    %v177 = vunpack.c.l.b16 %v162
    %v178 = vunpack.c.l.b16 %v163
    %v179 = vunpack.c.l.b16 %v164
    %v180 = vunpack.c.l.b16 %v165
    %v181 = vpack.c.b16 %v178, %v177
    %v182 = vpack.c.b16 %v180, %v179
    %v186 = vsel %vm67, %v161, 0
    %188 = vmatprep.subr.bf16.mxu0 0
    %189 = vmatpush1.bf16.msra.mxu0 %v181
    %190 = vmatprep.subr.bf16.mxu0 0
    %191 = vmatpush1.bf16.msra.mxu0 %v182
    %192 = vmatprep.subr.bf16.mxu0 0
    %193 = vmatpush1.bf16.msra.mxu0 0
    %194 = vmatprep.subr.bf16.mxu0 0
    %195 = vmatpush1.bf16.msra.mxu0 0
    %196 = vmatprep.subr.bf16.mxu0 0
    %197 = vmatpush1.bf16.msra.mxu0 0
    %198 = vmatprep.subr.bf16.mxu0 0
    %199 = vmatpush1.bf16.msra.mxu0 0
    %200 = vmatprep.subr.bf16.mxu0 0
    %201 = vmatpush1.bf16.msra.mxu0 0
    %202 = vmatprep.subr.bf16.mxu0 0
    %203 = vmatpush1.bf16.msra.mxu0 0
    %204 = vmatprep.subr.bf16.mxu0 0
    %205 = vmatpush1.bf16.msra.mxu0 0
    %206 = vmatprep.subr.bf16.mxu0 0
    %207 = vmatpush1.bf16.msra.mxu0 0
    %208 = vmatprep.subr.bf16.mxu0 0
    %209 = vmatpush1.bf16.msra.mxu0 0
    %210 = vmatprep.subr.bf16.mxu0 0
    %211 = vmatpush1.bf16.msra.mxu0 0
    %212 = vmatprep.subr.bf16.mxu0 0
    %213 = vmatpush1.bf16.msra.mxu0 0
    %214 = vmatprep.subr.bf16.mxu0 0
    %215 = vmatpush1.bf16.msra.mxu0 0
    %216 = vmatprep.subr.bf16.mxu0 0
    %217 = vmatpush1.bf16.msra.mxu0 0
    %218 = vmatprep.subr.bf16.mxu0 0
    %219 = vmatpush1.bf16.msra.mxu0 0
    %220 = vmatprep.mubr.bf16.mxu0 0
    %221 = vmatmul.mubr.bf16.gmra.mrb[0].mxu0 %v186
    %v222 = vpop.f32.mrb[0].mxu0
    %v223 = vadd.f32 %v171, %v222
    %v224 = vpop.f32.mrb[0].mxu0
    %v225 = vpop.f32.mrb[0].mxu0
    %v226 = vadd.f32 %v171, %v225
    %v227 = vpop.f32.mrb[0].mxu0
    %228 = vdwg.mxu0
    %v229 = vmul.f32 %v223, 0.5
    %v230 = vmul.f32 %v226, 0.5
    %v231 = vmul.f32 %v223, 0.70710677
    %v232 = vmul.f32 %v226, 0.70710677
    %v233 = verf.f32.pop %v231
    %v234 = verf.f32.pop %v232
    %v235 = vadd.f32 %v233, 1.0
    %v236 = vadd.f32 %v234, 1.0
    %v237 = vmul.f32 %v229, %v235
    %v238 = vmul.f32 %v230, %v236
    %v239 = vpack.c.bf16 %v238, %v237
    %v240 = vld [vmem:[%s8] sm:$0xf]
    %v241 = vld [vmem:[%s8 + $0x4] sm:$0xf]
    %v242 = vld [vmem:[%s8 + $0x8] sm:$0xf]
    %v243 = vld [vmem:[%s8 + $0xc] sm:$0xf]
    %v244 = vld [vmem:[%s8 + $0x10] sm:$0xf]
    %v245 = vld [vmem:[%s8 + $0x14] sm:$0xf]
    %v246 = vld [vmem:[%s8 + $0x18] sm:$0xf]
    %v247 = vld [vmem:[%s8 + $0x1c] sm:$0xf]
    %v248 = vld [vmem:[%s9] sm:$0x1]
    %v250 = vlaneseq
    %v251 = vshrl.u32 %v250, 7
    %v252 = vsub.s32 0, %v251
    %v253 = vrot.slane %v248, %v252
    %v263 = vunpack.c.l.b16 %v240
    %v264 = vunpack.c.l.b16 %v241
    %v265 = vunpack.c.l.b16 %v242
    %v266 = vunpack.c.l.b16 %v243
    %v267 = vunpack.c.l.b16 %v244
    %v268 = vunpack.c.l.b16 %v245
    %v269 = vunpack.c.l.b16 %v246
    %v270 = vunpack.c.l.b16 %v247
    %v271 = vpack.c.b16 %v264, %v263
    %v272 = vpack.c.b16 %v266, %v265
    %v273 = vpack.c.b16 %v268, %v267
    %v274 = vpack.c.b16 %v270, %v269
    %vm279 = vcmask 523264
    %v281 = vsel %vm279, %v239, 0
    %283 = vmatprep.subr.bf16.mxu0 0
    %284 = vmatpush1.bf16.msra.mxu0 %v271
    %285 = vmatprep.subr.bf16.mxu0 0
    %286 = vmatpush1.bf16.msra.mxu0 %v272
    %287 = vmatprep.subr.bf16.mxu0 0
    %288 = vmatpush1.bf16.msra.mxu0 %v273
    %289 = vmatprep.subr.bf16.mxu0 0
    %290 = vmatpush1.bf16.msra.mxu0 %v274
    %291 = vmatprep.subr.bf16.mxu0 0
    %292 = vmatpush1.bf16.msra.mxu0 0
    %293 = vmatprep.subr.bf16.mxu0 0
    %294 = vmatpush1.bf16.msra.mxu0 0
    %295 = vmatprep.subr.bf16.mxu0 0
    %296 = vmatpush1.bf16.msra.mxu0 0
    %297 = vmatprep.subr.bf16.mxu0 0
    %298 = vmatpush1.bf16.msra.mxu0 0
    %299 = vmatprep.subr.bf16.mxu0 0
    %300 = vmatpush1.bf16.msra.mxu0 0
    %301 = vmatprep.subr.bf16.mxu0 0
    %302 = vmatpush1.bf16.msra.mxu0 0
    %303 = vmatprep.subr.bf16.mxu0 0
    %304 = vmatpush1.bf16.msra.mxu0 0
    %305 = vmatprep.subr.bf16.mxu0 0
    %306 = vmatpush1.bf16.msra.mxu0 0
    %307 = vmatprep.subr.bf16.mxu0 0
    %308 = vmatpush1.bf16.msra.mxu0 0
    %309 = vmatprep.subr.bf16.mxu0 0
    %310 = vmatpush1.bf16.msra.mxu0 0
    %311 = vmatprep.subr.bf16.mxu0 0
    %312 = vmatpush1.bf16.msra.mxu0 0
    %313 = vmatprep.subr.bf16.mxu0 0
    %314 = vmatpush1.bf16.msra.mxu0 0
    %315 = vmatprep.mubr.bf16.mxu0 0
    %316 = vmatmul.mubr.bf16.gmra.mrb[0].mxu0 %v281
    %v317 = vpop.f32.mrb[0].mxu0
    %v318 = vadd.f32 %v253, %v317
    %v319 = vpop.f32.mrb[0].mxu0
    %v320 = vpop.f32.mrb[0].mxu0
    %v321 = vadd.f32 %v253, %v320
    %v322 = vpop.f32.mrb[0].mxu0
    %323 = vdwg.mxu0
    %v324 = vadd.f32 %v114, %v318
    %v325 = vadd.f32 %v115, %v321
    %326 = vst.msk [vmem:[#allocation2] sm:$0xff] %vm67, %v324
    %327 = vst.msk [vmem:[#allocation2 + $0x8] sm:$0xff] %vm67, %v325
    // Predicated region
    $region42: #{transformer_encoder.5} parent=1 // pred_check
      _
    $region43: #{transformer_encoder.5} parent=1 // pred_check_branch
      %329 = sbr.rel (0) target = $region45
    $region44: #{transformer_encoder.5} parent=1 // pred_region
      %s331 = ssub.s32 256, 256
      %332 = vsyncadd [#allocation3], %s331
      %s333 = sshll.u32 [#allocation2], 4
      %s334 = int_to_ptr.vmem [resolvable:$true] %s333
      %339 = dma.vmem_to_hbm [thread:$0]  %s334, 256, %s10, [#allocation3], 128, 128, 8
    $region45: #{transformer_encoder.5} parent=1 // pred_fallthru
      _
    // Predicated region
    $region46: #{transformer_encoder.5} parent=1 // pred_check
      _
    $region47: #{transformer_encoder.5} parent=1 // pred_check_branch
      %341 = sbr.rel (0) target = $region49
    $region48: #{transformer_encoder.5} parent=1 // pred_region
      %342 = dma.done [#allocation3], 256
    $region49: #{transformer_encoder.5} parent=1 // pred_fallthru
      _
    %343 = vsyncpa [#allocation3], 1

</llo_original>
